<compile_context>
chip_gen: v7x
topology: tpu7x:2x2x1
jax: 0.10.0
libtpu: 0.0.40
codegen_flags: <defaults>
</compile_context>

<pallas_src>
import functools

import jax
import jax.numpy as jnp
from jax import lax
from jax.experimental import pallas as pl
from jax.experimental.pallas import tpu as pltpu


def _double_conv_kernel(x_ref, w1_ref, b1_ref, w2_ref, b2_ref, o_ref,
                        p1_ref, s2_ref, *, H2, W2, vert_on_value):
    """One batch element per grid step.

    x_ref : (1, 4*H2*W2, Cin)   input, the 4 maxpool phases stacked on the row axis
    w1_ref: (Cin, Cmid)         1x1 conv weight
    b1_ref: (1, Cmid)           1x1 conv bias
    w2_ref: (9*Cmid, Cout)      3x3 conv weight, rows ordered (kh, kw, cin)
    b2_ref: (1, Cout)           3x3 conv bias
    o_ref : (1, Hf, Wf, Cout)   output tile (NHWC)
    p1_ref: (H2*W2 + W2, Cmid)  scratch: pooled conv1 activations (+ zero pad rows)
    s2_ref:                     scratch: conv2 rows feeding the second maxpool
    """
    HW2 = H2 * W2
    Ho, Wo = H2 - 2, W2 - 2
    Hf, Wf = Ho // 2, Wo // 2
    M2 = Ho * W2                      # conv2 evaluated on full-width (W2) rows
    Cmid = w1_ref.shape[1]

    # ---- conv1 (1x1): one flat 2D MXU matmul over all 4 pool phases ----
    y = jnp.dot(x_ref[0], w1_ref[...],
                preferred_element_type=jnp.float32)            # (4*HW2, Cmid)

    # ---- maxpool 2x2 == max over the 4 phase blocks; bias + ReLU after the pool ----
    p1 = jnp.maximum(jnp.maximum(y[0 * HW2:1 * HW2], y[1 * HW2:2 * HW2]),
                     jnp.maximum(y[2 * HW2:3 * HW2], y[3 * HW2:4 * HW2]))
    p1 = jnp.maximum(p1 + b1_ref[...], 0.0)                    # (HW2, Cmid)

    # Stash p1 (plus zeroed pad rows) so the 9 conv2 taps can be read as contiguous
    # row slabs; the pad rows only ever feed columns that are later discarded.
    p1_ref[pl.ds(0, HW2), :] = p1
    p1_ref[pl.ds(HW2, W2), :] = jnp.zeros((W2, Cmid), jnp.float32)

    # ---- conv2 (3x3 VALID): 9 accumulated broadcast-free 2D MXU matmuls ----
    acc = None
    for di in range(3):
        for dj in range(3):
            tap = di * 3 + dj
            slab = p1_ref[pl.ds(di * W2 + dj, M2), :]          # (M2, Cmid)
            wk = w2_ref[pl.ds(tap * Cmid, Cmid), :]            # (Cmid, Cout)
            part = jnp.dot(slab, wk, preferred_element_type=jnp.float32)
            acc = part if acc is None else acc + part          # (M2, Cout)

    # ---- maxpool 2x2 (floor) + bias + ReLU ----
    b2 = b2_ref[...]                                           # (1, Cout)
    if vert_on_value:
        # Reduce the vertical (row i vs i+1) direction on the value with aligned
        # slices before touching VMEM: halves the scratch traffic of pool #2.
        vert = jnp.maximum(acc[:M2 - W2], acc[W2:])            # ((Ho-1)*W2, Cout)
        s2_ref[...] = vert
        for hf in range(Hf):
            base = 2 * hf * W2
            a = s2_ref[pl.ds(base, Wf, 2), :]
            b = s2_ref[pl.ds(base + 1, Wf, 2), :]
            row = jnp.maximum(a, b)
            o_ref[0, hf, :, :] = jnp.maximum(row + b2, 0.0).astype(o_ref.dtype)
    else:
        s2_ref[...] = acc
        for hf in range(Hf):
            base = 2 * hf * W2
            a = s2_ref[pl.ds(base, Wf, 2), :]
            b = s2_ref[pl.ds(base + 1, Wf, 2), :]
            c = s2_ref[pl.ds(base + W2, Wf, 2), :]
            d = s2_ref[pl.ds(base + W2 + 1, Wf, 2), :]
            row = jnp.maximum(jnp.maximum(a, b), jnp.maximum(c, d))
            o_ref[0, hf, :, :] = jnp.maximum(row + b2, 0.0).astype(o_ref.dtype)


def double_conv(x_nchw, w1_oihw, b1, w2_oihw, b2):
    """Pallas DoubleConv forward.

    x_nchw : (N, Cin, H, W) f32; weights in PyTorch layouts:
    w1_oihw: (Cmid, Cin, 1, 1), b1: (Cmid,), w2_oihw: (Cout, Cmid, 3, 3), b2: (Cout,).
    Returns (N, Cout, (H//2-2)//2, (W//2-2)//2).
    """
    N, Cin, H, W = x_nchw.shape
    Cmid = w1_oihw.shape[0]
    Cout = w2_oihw.shape[0]
    H2, W2 = H // 2, W // 2
    Ho, Wo = H2 - 2, W2 - 2
    Hf, Wf = Ho // 2, Wo // 2
    assert Ho >= 2 and Wo >= 2, "spatial dims too small for conv3x3 + maxpool"
    assert (H2 * W2) % 8 == 0, "H/2 * W/2 must be a multiple of 8"
    vert_on_value = (W2 % 8 == 0)

    # ---- layout prep in plain XLA (cheap, outside the kernel) ----
    # NCHW -> NHWC, crop to even H/W, split the four 2x2-maxpool phases and stack
    # them along the matmul M axis (pool #1 becomes a max over 4 row blocks).
    x = jnp.transpose(x_nchw, (0, 2, 3, 1))[:, :2 * H2, :2 * W2, :]
    phases = [x[:, a::2, b::2, :].reshape(N, H2 * W2, Cin)
              for a in (0, 1) for b in (0, 1)]
    xp = jnp.concatenate(phases, axis=1)                       # (N, 4*H2*W2, Cin)

    w1 = jnp.transpose(w1_oihw.reshape(Cmid, Cin))             # (Cin, Cmid)
    # OIHW -> (kh, kw, cin, cout) -> (9*Cmid, Cout); row index = (kh*3 + kw)*Cmid + cin
    w2 = jnp.transpose(w2_oihw, (2, 3, 1, 0)).reshape(9 * Cmid, Cout)
    b1r = jnp.reshape(b1, (1, Cmid)).astype(jnp.float32)
    b2r = jnp.reshape(b2, (1, Cout)).astype(jnp.float32)

    s2_rows = (Ho - 1) * W2 if vert_on_value else Ho * W2
    kernel = functools.partial(_double_conv_kernel, H2=H2, W2=W2,
                               vert_on_value=vert_on_value)

    out = pl.pallas_call(
        kernel,
        out_shape=jax.ShapeDtypeStruct((N, Hf, Wf, Cout), x_nchw.dtype),
        grid_spec=pltpu.PrefetchScalarGridSpec(
            num_scalar_prefetch=0,
            grid=(N,),
            in_specs=[
                pl.BlockSpec((1, 4 * H2 * W2, Cin), lambda n: (n, 0, 0)),
                pl.BlockSpec((Cin, Cmid), lambda n: (0, 0)),
                pl.BlockSpec((1, Cmid), lambda n: (0, 0)),
                pl.BlockSpec((9 * Cmid, Cout), lambda n: (0, 0)),
                pl.BlockSpec((1, Cout), lambda n: (0, 0)),
            ],
            out_specs=pl.BlockSpec((1, Hf, Wf, Cout), lambda n: (n, 0, 0, 0)),
            scratch_shapes=[
                pltpu.VMEM((H2 * W2 + W2, Cmid), jnp.float32),  # pooled conv1 (+ pad)
                pltpu.VMEM((s2_rows, Cout), jnp.float32),       # conv2 rows for pool #2
            ],
        ),
        # Batch elements are independent: let Mosaic shard the grid across
        # TensorCores on multi-TC chips (v7x); harmless on v5e/v6e.
        compiler_params=pltpu.CompilerParams(
            dimension_semantics=("parallel",)),
    )(xp, w1, b1r, w2, b2r)

    return jnp.transpose(out, (0, 3, 1, 2))                    # NHWC -> NCHW


def double_conv_ref(x_nchw, w1_oihw, b1, w2_oihw, b2):
    """Pure-JAX reference mirroring the PyTorch module exactly."""
    dn = ('NCHW', 'OIHW', 'NCHW')
    y = lax.conv_general_dilated(x_nchw, w1_oihw, (1, 1), 'VALID',
                                 dimension_numbers=dn) + b1.reshape(1, -1, 1, 1)
    y = lax.reduce_window(y, -jnp.inf, lax.max, (1, 1, 2, 2), (1, 1, 2, 2), 'VALID')
    y = jnp.maximum(y, 0.0)
    y = lax.conv_general_dilated(y, w2_oihw, (1, 1), 'VALID',
                                 dimension_numbers=dn) + b2.reshape(1, -1, 1, 1)
    y = lax.reduce_window(y, -jnp.inf, lax.max, (1, 1, 2, 2), (1, 1, 2, 2), 'VALID')
    y = jnp.maximum(y, 0.0)
    return y


if __name__ == "__main__":
    N, in_ch, mid_ch, out_ch, H, W = 2, 4, 8, 8, 16, 16

    key = jax.random.PRNGKey(0)
    k1, k2, k3, k4, k5 = jax.random.split(key, 5)
    x = jax.random.normal(k1, (N, in_ch, H, W), jnp.float32)
    # PyTorch-shaped parameters for Conv2d(in,mid,1) and Conv2d(mid,out,3).
    w1 = jax.random.normal(k2, (mid_ch, in_ch, 1, 1), jnp.float32) * 0.1
    b1 = jax.random.normal(k3, (mid_ch,), jnp.float32) * 0.1
    w2 = jax.random.normal(k4, (out_ch, mid_ch, 3, 3), jnp.float32) * 0.1
    b2 = jax.random.normal(k5, (out_ch,), jnp.float32) * 0.1

    out = jax.block_until_ready(double_conv(x, w1, b1, w2, b2))
    ref = double_conv_ref(x, w1, b1, w2, b2)

    assert out.shape == (N, out_ch, (H // 2 - 2) // 2, (W // 2 - 2) // 2), out.shape
    if not jnp.allclose(out, ref, atol=1e-3, rtol=1e-3):
        raise AssertionError("Pallas kernel output mismatch vs JAX reference")
    print("KERNEL_OK")
</pallas_src>

<mosaic_0001>
module attributes {stable_mosaic.version = 11 : i64} {
  func.func @_double_conv_kernel(%arg0: i32, %arg1: memref<1x256x4xf32, #tpu.memory_space<vmem>>, %arg2: memref<4x8xf32, #tpu.memory_space<vmem>>, %arg3: memref<1x8xf32, #tpu.memory_space<vmem>>, %arg4: memref<72x8xf32, #tpu.memory_space<vmem>>, %arg5: memref<1x8xf32, #tpu.memory_space<vmem>>, %arg6: memref<1x3x3x8xf32, #tpu.memory_space<vmem>>, %arg7: memref<72x8xf32, #tpu.memory_space<vmem>>, %arg8: memref<40x8xf32, #tpu.memory_space<vmem>>) attributes {dimension_semantics = [#tpu.dimension_semantics<parallel>], iteration_bounds = array<i64: 2>, scalar_prefetch = 0 : i64, scratch_operands = 2 : i64, tpu.core_type = #tpu.core_type<tc>, window_params = [{transform_indices = @transform_0, window_bounds = array<i64: 1, 256, 4>}, {pipeline_mode = #tpu.pipeline_mode<synchronous>, transform_indices = @transform_1, window_bounds = array<i64: 4, 8>}, {pipeline_mode = #tpu.pipeline_mode<synchronous>, transform_indices = @transform_2, window_bounds = array<i64: 1, 8>}, {pipeline_mode = #tpu.pipeline_mode<synchronous>, transform_indices = @transform_3, window_bounds = array<i64: 72, 8>}, {pipeline_mode = #tpu.pipeline_mode<synchronous>, transform_indices = @transform_4, window_bounds = array<i64: 1, 8>}, {transform_indices = @transform_5, window_bounds = array<i64: 1, 3, 3, 8>}]} {
    %c0 = arith.constant 0 : index
    %c0_0 = arith.constant 0 : index
    %c0_1 = arith.constant 0 : index
    %0 = vector.load %arg1[%c0, %c0_0, %c0_1] : memref<1x256x4xf32, #tpu.memory_space<vmem>>, vector<1x256x4xf32>
    %1 = vector.shape_cast %0 : vector<1x256x4xf32> to vector<256x4xf32>
    %c0_2 = arith.constant 0 : index
    %c0_3 = arith.constant 0 : index
    %2 = vector.load %arg2[%c0_2, %c0_3] : memref<4x8xf32, #tpu.memory_space<vmem>>, vector<4x8xf32>
    %cst = arith.constant dense<0.000000e+00> : vector<256x8xf32>
    %3 = tpu.matmul %1, %2, %cst {dimension_numbers = #tpu.dot_dimension_numbers<[1], [0], [0], [1], [0, 0, 1, 1], [], []>} : vector<256x4xf32>, vector<4x8xf32>, vector<256x8xf32> -> vector<256x8xf32>
    %4 = vector.extract_strided_slice %3 {offsets = [0, 0], sizes = [64, 8], strides = [1, 1]} : vector<256x8xf32> to vector<64x8xf32>
    %5 = vector.extract_strided_slice %3 {offsets = [64, 0], sizes = [64, 8], strides = [1, 1]} : vector<256x8xf32> to vector<64x8xf32>
    %6 = arith.maximumf %4, %5 : vector<64x8xf32>
    %7 = vector.extract_strided_slice %3 {offsets = [128, 0], sizes = [64, 8], strides = [1, 1]} : vector<256x8xf32> to vector<64x8xf32>
    %8 = vector.extract_strided_slice %3 {offsets = [192, 0], sizes = [64, 8], strides = [1, 1]} : vector<256x8xf32> to vector<64x8xf32>
    %9 = arith.maximumf %7, %8 : vector<64x8xf32>
    %10 = arith.maximumf %6, %9 : vector<64x8xf32>
    %c0_4 = arith.constant 0 : index
    %c0_5 = arith.constant 0 : index
    %11 = vector.load %arg3[%c0_4, %c0_5] : memref<1x8xf32, #tpu.memory_space<vmem>>, vector<1x8xf32>
    %12 = vector.broadcast %11 : vector<1x8xf32> to vector<64x8xf32>
    %13 = arith.addf %10, %12 : vector<64x8xf32>
    %cst_6 = arith.constant 0.000000e+00 : f32
    %14 = vector.broadcast %cst_6 : f32 to vector<64x8xf32>
    %15 = arith.maximumf %13, %14 : vector<64x8xf32>
    %c0_7 = arith.constant 0 : index
    %c0_8 = arith.constant 0 : index
    %16 = vector.load %arg7[%c0_7, %c0_8] : memref<72x8xf32, #tpu.memory_space<vmem>>, vector<64x8xf32>
    tpu.vector_store %arg7[%c0_7, %c0_8], %15 {strides = array<i32>} : memref<72x8xf32, #tpu.memory_space<vmem>>, vector<64x8xf32>,
    %cst_9 = arith.constant 0.000000e+00 : f32
    %17 = vector.broadcast %cst_9 : f32 to vector<8x8xf32>
    %c64 = arith.constant 64 : index
    %c0_10 = arith.constant 0 : index
    %18 = vector.load %arg7[%c64, %c0_10] : memref<72x8xf32, #tpu.memory_space<vmem>>, vector<8x8xf32>
    tpu.vector_store %arg7[%c64, %c0_10], %17 {strides = array<i32>} : memref<72x8xf32, #tpu.memory_space<vmem>>, vector<8x8xf32>,
    %c0_11 = arith.constant 0 : index
    %c0_12 = arith.constant 0 : index
    %19 = vector.load %arg7[%c0_11, %c0_12] : memref<72x8xf32, #tpu.memory_space<vmem>>, vector<48x8xf32>
    %c0_13 = arith.constant 0 : index
    %c0_14 = arith.constant 0 : index
    %20 = vector.load %arg4[%c0_13, %c0_14] : memref<72x8xf32, #tpu.memory_space<vmem>>, vector<8x8xf32>
    %cst_15 = arith.constant dense<0.000000e+00> : vector<48x8xf32>
    %21 = tpu.matmul %19, %20, %cst_15 {dimension_numbers = #tpu.dot_dimension_numbers<[1], [0], [0], [1], [0, 0, 1, 1], [], []>} : vector<48x8xf32>, vector<8x8xf32>, vector<48x8xf32> -> vector<48x8xf32>
    %c1 = arith.constant 1 : index
    %c0_16 = arith.constant 0 : index
    %22 = vector.load %arg7[%c1, %c0_16] : memref<72x8xf32, #tpu.memory_space<vmem>>, vector<48x8xf32>
    %c8 = arith.constant 8 : index
    %c0_17 = arith.constant 0 : index
    %23 = vector.load %arg4[%c8, %c0_17] : memref<72x8xf32, #tpu.memory_space<vmem>>, vector<8x8xf32>
    %cst_18 = arith.constant dense<0.000000e+00> : vector<48x8xf32>
    %24 = tpu.matmul %22, %23, %cst_18 {dimension_numbers = #tpu.dot_dimension_numbers<[1], [0], [0], [1], [0, 0, 1, 1], [], []>} : vector<48x8xf32>, vector<8x8xf32>, vector<48x8xf32> -> vector<48x8xf32>
    %25 = arith.addf %21, %24 : vector<48x8xf32>
    %c2 = arith.constant 2 : index
    %c0_19 = arith.constant 0 : index
    %26 = vector.load %arg7[%c2, %c0_19] : memref<72x8xf32, #tpu.memory_space<vmem>>, vector<48x8xf32>
    %c16 = arith.constant 16 : index
    %c0_20 = arith.constant 0 : index
    %27 = vector.load %arg4[%c16, %c0_20] : memref<72x8xf32, #tpu.memory_space<vmem>>, vector<8x8xf32>
    %cst_21 = arith.constant dense<0.000000e+00> : vector<48x8xf32>
    %28 = tpu.matmul %26, %27, %cst_21 {dimension_numbers = #tpu.dot_dimension_numbers<[1], [0], [0], [1], [0, 0, 1, 1], [], []>} : vector<48x8xf32>, vector<8x8xf32>, vector<48x8xf32> -> vector<48x8xf32>
    %29 = arith.addf %25, %28 : vector<48x8xf32>
    %c8_22 = arith.constant 8 : index
    %c0_23 = arith.constant 0 : index
    %30 = vector.load %arg7[%c8_22, %c0_23] : memref<72x8xf32, #tpu.memory_space<vmem>>, vector<48x8xf32>
    %c24 = arith.constant 24 : index
    %c0_24 = arith.constant 0 : index
    %31 = vector.load %arg4[%c24, %c0_24] : memref<72x8xf32, #tpu.memory_space<vmem>>, vector<8x8xf32>
    %cst_25 = arith.constant dense<0.000000e+00> : vector<48x8xf32>
    %32 = tpu.matmul %30, %31, %cst_25 {dimension_numbers = #tpu.dot_dimension_numbers<[1], [0], [0], [1], [0, 0, 1, 1], [], []>} : vector<48x8xf32>, vector<8x8xf32>, vector<48x8xf32> -> vector<48x8xf32>
    %33 = arith.addf %29, %32 : vector<48x8xf32>
    %c9 = arith.constant 9 : index
    %c0_26 = arith.constant 0 : index
    %34 = vector.load %arg7[%c9, %c0_26] : memref<72x8xf32, #tpu.memory_space<vmem>>, vector<48x8xf32>
    %c32 = arith.constant 32 : index
    %c0_27 = arith.constant 0 : index
    %35 = vector.load %arg4[%c32, %c0_27] : memref<72x8xf32, #tpu.memory_space<vmem>>, vector<8x8xf32>
    %cst_28 = arith.constant dense<0.000000e+00> : vector<48x8xf32>
    %36 = tpu.matmul %34, %35, %cst_28 {dimension_numbers = #tpu.dot_dimension_numbers<[1], [0], [0], [1], [0, 0, 1, 1], [], []>} : vector<48x8xf32>, vector<8x8xf32>, vector<48x8xf32> -> vector<48x8xf32>
    %37 = arith.addf %33, %36 : vector<48x8xf32>
    %c10 = arith.constant 10 : index
    %c0_29 = arith.constant 0 : index
    %38 = vector.load %arg7[%c10, %c0_29] : memref<72x8xf32, #tpu.memory_space<vmem>>, vector<48x8xf32>
    %c40 = arith.constant 40 : index
    %c0_30 = arith.constant 0 : index
    %39 = vector.load %arg4[%c40, %c0_30] : memref<72x8xf32, #tpu.memory_space<vmem>>, vector<8x8xf32>
    %cst_31 = arith.constant dense<0.000000e+00> : vector<48x8xf32>
    %40 = tpu.matmul %38, %39, %cst_31 {dimension_numbers = #tpu.dot_dimension_numbers<[1], [0], [0], [1], [0, 0, 1, 1], [], []>} : vector<48x8xf32>, vector<8x8xf32>, vector<48x8xf32> -> vector<48x8xf32>
    %41 = arith.addf %37, %40 : vector<48x8xf32>
    %c16_32 = arith.constant 16 : index
    %c0_33 = arith.constant 0 : index
    %42 = vector.load %arg7[%c16_32, %c0_33] : memref<72x8xf32, #tpu.memory_space<vmem>>, vector<48x8xf32>
    %c48 = arith.constant 48 : index
    %c0_34 = arith.constant 0 : index
    %43 = vector.load %arg4[%c48, %c0_34] : memref<72x8xf32, #tpu.memory_space<vmem>>, vector<8x8xf32>
    %cst_35 = arith.constant dense<0.000000e+00> : vector<48x8xf32>
    %44 = tpu.matmul %42, %43, %cst_35 {dimension_numbers = #tpu.dot_dimension_numbers<[1], [0], [0], [1], [0, 0, 1, 1], [], []>} : vector<48x8xf32>, vector<8x8xf32>, vector<48x8xf32> -> vector<48x8xf32>
    %45 = arith.addf %41, %44 : vector<48x8xf32>
    %c17 = arith.constant 17 : index
    %c0_36 = arith.constant 0 : index
    %46 = vector.load %arg7[%c17, %c0_36] : memref<72x8xf32, #tpu.memory_space<vmem>>, vector<48x8xf32>
    %c56 = arith.constant 56 : index
    %c0_37 = arith.constant 0 : index
    %47 = vector.load %arg4[%c56, %c0_37] : memref<72x8xf32, #tpu.memory_space<vmem>>, vector<8x8xf32>
    %cst_38 = arith.constant dense<0.000000e+00> : vector<48x8xf32>
    %48 = tpu.matmul %46, %47, %cst_38 {dimension_numbers = #tpu.dot_dimension_numbers<[1], [0], [0], [1], [0, 0, 1, 1], [], []>} : vector<48x8xf32>, vector<8x8xf32>, vector<48x8xf32> -> vector<48x8xf32>
    %49 = arith.addf %45, %48 : vector<48x8xf32>
    %c18 = arith.constant 18 : index
    %c0_39 = arith.constant 0 : index
    %50 = vector.load %arg7[%c18, %c0_39] : memref<72x8xf32, #tpu.memory_space<vmem>>, vector<48x8xf32>
    %c64_40 = arith.constant 64 : index
    %c0_41 = arith.constant 0 : index
    %51 = vector.load %arg4[%c64_40, %c0_41] : memref<72x8xf32, #tpu.memory_space<vmem>>, vector<8x8xf32>
    %cst_42 = arith.constant dense<0.000000e+00> : vector<48x8xf32>
    %52 = tpu.matmul %50, %51, %cst_42 {dimension_numbers = #tpu.dot_dimension_numbers<[1], [0], [0], [1], [0, 0, 1, 1], [], []>} : vector<48x8xf32>, vector<8x8xf32>, vector<48x8xf32> -> vector<48x8xf32>
    %53 = arith.addf %49, %52 : vector<48x8xf32>
    %c0_43 = arith.constant 0 : index
    %c0_44 = arith.constant 0 : index
    %54 = vector.load %arg5[%c0_43, %c0_44] : memref<1x8xf32, #tpu.memory_space<vmem>>, vector<1x8xf32>
    %55 = vector.extract_strided_slice %53 {offsets = [0, 0], sizes = [40, 8], strides = [1, 1]} : vector<48x8xf32> to vector<40x8xf32>
    %56 = vector.extract_strided_slice %53 {offsets = [8, 0], sizes = [40, 8], strides = [1, 1]} : vector<48x8xf32> to vector<40x8xf32>
    %57 = arith.maximumf %55, %56 : vector<40x8xf32>
    %c0_45 = arith.constant 0 : index
    %c0_46 = arith.constant 0 : index
    %58 = vector.load %arg8[%c0_45, %c0_46] : memref<40x8xf32, #tpu.memory_space<vmem>>, vector<40x8xf32>
    tpu.vector_store %arg8[%c0_45, %c0_46], %57 {strides = array<i32>} : memref<40x8xf32, #tpu.memory_space<vmem>>, vector<40x8xf32>,
    %c0_47 = arith.constant 0 : index
    %c0_48 = arith.constant 0 : index
    %59 = tpu.strided_load %arg8[%c0_47, %c0_48] {strides = array<i32: 2, 1>} : memref<40x8xf32, #tpu.memory_space<vmem>>, vector<3x8xf32>
    %c1_49 = arith.constant 1 : index
    %c0_50 = arith.constant 0 : index
    %60 = tpu.strided_load %arg8[%c1_49, %c0_50] {strides = array<i32: 2, 1>} : memref<40x8xf32, #tpu.memory_space<vmem>>, vector<3x8xf32>
    %61 = arith.maximumf %59, %60 : vector<3x8xf32>
    %62 = vector.broadcast %54 : vector<1x8xf32> to vector<3x8xf32>
    %63 = arith.addf %61, %62 : vector<3x8xf32>
    %cst_51 = arith.constant 0.000000e+00 : f32
    %64 = vector.broadcast %cst_51 : f32 to vector<3x8xf32>
    %65 = arith.maximumf %63, %64 : vector<3x8xf32>
    %c0_52 = arith.constant 0 : index
    %c0_53 = arith.constant 0 : index
    %c0_54 = arith.constant 0 : index
    %c0_55 = arith.constant 0 : index
    %66 = vector.load %arg6[%c0_52, %c0_53, %c0_54, %c0_55] : memref<1x3x3x8xf32, #tpu.memory_space<vmem>>, vector<1x1x3x8xf32>
    %67 = vector.shape_cast %66 : vector<1x1x3x8xf32> to vector<3x8xf32>
    %68 = vector.shape_cast %65 : vector<3x8xf32> to vector<1x1x3x8xf32>
    tpu.vector_store %arg6[%c0_52, %c0_53, %c0_54, %c0_55], %68 {strides = array<i32>} : memref<1x3x3x8xf32, #tpu.memory_space<vmem>>, vector<1x1x3x8xf32>,
    %c16_56 = arith.constant 16 : index
    %c0_57 = arith.constant 0 : index
    %69 = tpu.strided_load %arg8[%c16_56, %c0_57] {strides = array<i32: 2, 1>} : memref<40x8xf32, #tpu.memory_space<vmem>>, vector<3x8xf32>
    %c17_58 = arith.constant 17 : index
    %c0_59 = arith.constant 0 : index
    %70 = tpu.strided_load %arg8[%c17_58, %c0_59] {strides = array<i32: 2, 1>} : memref<40x8xf32, #tpu.memory_space<vmem>>, vector<3x8xf32>
    %71 = arith.maximumf %69, %70 : vector<3x8xf32>
    %72 = vector.broadcast %54 : vector<1x8xf32> to vector<3x8xf32>
    %73 = arith.addf %71, %72 : vector<3x8xf32>
    %cst_60 = arith.constant 0.000000e+00 : f32
    %74 = vector.broadcast %cst_60 : f32 to vector<3x8xf32>
    %75 = arith.maximumf %73, %74 : vector<3x8xf32>
    %c0_61 = arith.constant 0 : index
    %c1_62 = arith.constant 1 : index
    %c0_63 = arith.constant 0 : index
    %c0_64 = arith.constant 0 : index
    %76 = vector.load %arg6[%c0_61, %c1_62, %c0_63, %c0_64] : memref<1x3x3x8xf32, #tpu.memory_space<vmem>>, vector<1x1x3x8xf32>
    %77 = vector.shape_cast %76 : vector<1x1x3x8xf32> to vector<3x8xf32>
    %78 = vector.shape_cast %75 : vector<3x8xf32> to vector<1x1x3x8xf32>
    tpu.vector_store %arg6[%c0_61, %c1_62, %c0_63, %c0_64], %78 {strides = array<i32>} : memref<1x3x3x8xf32, #tpu.memory_space<vmem>>, vector<1x1x3x8xf32>,
    %c32_65 = arith.constant 32 : index
    %c0_66 = arith.constant 0 : index
    %79 = tpu.strided_load %arg8[%c32_65, %c0_66] {strides = array<i32: 2, 1>} : memref<40x8xf32, #tpu.memory_space<vmem>>, vector<3x8xf32>
    %c33 = arith.constant 33 : index
    %c0_67 = arith.constant 0 : index
    %80 = tpu.strided_load %arg8[%c33, %c0_67] {strides = array<i32: 2, 1>} : memref<40x8xf32, #tpu.memory_space<vmem>>, vector<3x8xf32>
    %81 = arith.maximumf %79, %80 : vector<3x8xf32>
    %82 = vector.broadcast %54 : vector<1x8xf32> to vector<3x8xf32>
    %83 = arith.addf %81, %82 : vector<3x8xf32>
    %cst_68 = arith.constant 0.000000e+00 : f32
    %84 = vector.broadcast %cst_68 : f32 to vector<3x8xf32>
    %85 = arith.maximumf %83, %84 : vector<3x8xf32>
    %c0_69 = arith.constant 0 : index
    %c2_70 = arith.constant 2 : index
    %c0_71 = arith.constant 0 : index
    %c0_72 = arith.constant 0 : index
    %86 = vector.load %arg6[%c0_69, %c2_70, %c0_71, %c0_72] : memref<1x3x3x8xf32, #tpu.memory_space<vmem>>, vector<1x1x3x8xf32>
    %87 = vector.shape_cast %86 : vector<1x1x3x8xf32> to vector<3x8xf32>
    %88 = vector.shape_cast %85 : vector<3x8xf32> to vector<1x1x3x8xf32>
    tpu.vector_store %arg6[%c0_69, %c2_70, %c0_71, %c0_72], %88 {strides = array<i32>} : memref<1x3x3x8xf32, #tpu.memory_space<vmem>>, vector<1x1x3x8xf32>,
    return
  }
  func.func @transform_0(%arg0: i32) -> (i32, i32, i32) {
    %c0_i32 = arith.constant 0 : i32
    %c0_i32_0 = arith.constant 0 : i32
    %c0_i32_1 = arith.constant 0 : i32
    return %arg0, %c0_i32, %c0_i32_0 : i32, i32, i32
  }
  func.func @transform_1(%arg0: i32) -> (i32, i32) {
    %c0_i32 = arith.constant 0 : i32
    %c0_i32_0 = arith.constant 0 : i32
    %c0_i32_1 = arith.constant 0 : i32
    return %c0_i32, %c0_i32_0 : i32, i32
  }
  func.func @transform_2(%arg0: i32) -> (i32, i32) {
    %c0_i32 = arith.constant 0 : i32
    %c0_i32_0 = arith.constant 0 : i32
    %c0_i32_1 = arith.constant 0 : i32
    return %c0_i32, %c0_i32_0 : i32, i32
  }
  func.func @transform_3(%arg0: i32) -> (i32, i32) {
    %c0_i32 = arith.constant 0 : i32
    %c0_i32_0 = arith.constant 0 : i32
    %c0_i32_1 = arith.constant 0 : i32
    return %c0_i32, %c0_i32_0 : i32, i32
  }
  func.func @transform_4(%arg0: i32) -> (i32, i32) {
    %c0_i32 = arith.constant 0 : i32
    %c0_i32_0 = arith.constant 0 : i32
    %c0_i32_1 = arith.constant 0 : i32
    return %c0_i32, %c0_i32_0 : i32, i32
  }
  func.func @transform_5(%arg0: i32) -> (i32, i32, i32, i32) {
    %c0_i32 = arith.constant 0 : i32
    %c0_i32_0 = arith.constant 0 : i32
    %c0_i32_1 = arith.constant 0 : i32
    %c0_i32_2 = arith.constant 0 : i32
    return %arg0, %c0_i32, %c0_i32_0, %c0_i32_1 : i32, i32, i32, i32
  }
}

</mosaic_0001>

<llo_original>
// kernel: tpu_custom_call.1
$region0: #{tpu_custom_call.1}
  #allocation0 [shape = 'u32[]', space=smem, size = 0x4, offset = 0x4, fixed_abs, tag = 'smem constant byte address 0x4 - core index']
  #allocation1 [shape = 'u32[144,128]{1,0:T(1,128)}', space=vmem, size = 0x12000, scoped, tag = 'internal scratch']
  #allocation2 [shape = 'f32[72,8]{1,0:T(8,128)}', space=vmem, size = 0x9000, scoped, tag = 'scratch operand']
  #allocation3 [shape = 'f32[40,8]{1,0:T(8,128)}', space=vmem, size = 0x5000, scoped, tag = 'scratch operand']
  %s0 = inlined_call_operand.vmem [shape: f32[2,256,4], index: 0, kind: input, shape index: {}]
  %s1 = inlined_call_operand.vmem [shape: f32[4,8], index: 1, kind: input, shape index: {}]
  %s2 = inlined_call_operand.vmem [shape: f32[1,8], index: 2, kind: input, shape index: {}]
  %s3 = inlined_call_operand.vmem [shape: f32[72,8], index: 3, kind: input, shape index: {}]
  %s4 = inlined_call_operand.vmem [shape: f32[1,8], index: 4, kind: input, shape index: {}]
  %s5 = inlined_call_operand.vmem [shape: f32[2,3,3,8], index: 5, kind: output, shape index: {}]
  %s6 = sld [smem:[#allocation0]]
  $region53: #{tpu_custom_call.1} parent=0
    _
  %s8 = ssub.s32 1, %s6
  %s9 = scalar_select 0, %s8, %s6
  loop: start=0, step=1, limit=4
  $region2: #{tpu_custom_call.1} parent=0 // loop_pre_header
    _
  $region3: #{tpu_custom_call.1} parent=0 // loop_header
    %s11 = sphi 0, %s15
    %p12 = scmp.ge.s32.totalorder %s11, 4
    %s21 = sphi 0, %s23
    %s24 = sphi 0, %s21
    %s25 = sphi 0, %s24
    %s41 = sphi 0, %s25
    %s45 = sphi 0, %s45
    %s47 = sphi 0, %s45
    %s48 = sphi 0, %s47
    %s62 = sphi 0, %s48
    %s66 = sphi 0, %s66
    %s68 = sphi 0, %s66
    %s69 = sphi 0, %s68
    %s83 = sphi 0, %s69
    %s87 = sphi 0, %s87
    %s89 = sphi 0, %s87
    %s90 = sphi 0, %s89
    %s104 = sphi 0, %s90
    %s108 = sphi 0, %s108
    %s110 = sphi 0, %s108
    %s111 = sphi 0, %s110
    %s125 = sphi 0, %s111
    %s131 = sphi 0, %s133
    %s134 = sphi 0, %s131
    %s135 = sphi 0, %s134
    %s151 = sphi 0, %s135
  $region4: #{tpu_custom_call.1} parent=0 // loop_header_branch
    %14 = sbr.rel (%p12) target = $region8
  $region5: #{tpu_custom_call.1} parent=0 // loop_body
    %s16 = ssub.s32 %s11, 1
    %s17 = ssub.s32 %s11, 2
    %s18 = sadd.s32 %s11, 1
    %s19 = ssub.s32 %s11, %s18
    %p20 = scmp.eq.s32.totalorder %s19, 0
    %s22 = sadd.s32 %s21, 1
    %s23 = scalar_select %p20, %s21, %s22
    %p26 = pneg %p20
    %p27 = scmp.eq.s32.totalorder %s11, 1
    %p28 = por %p26, %p27
    %p29 = scmp.ne.s32.totalorder %s21, %s24
    %p30 = scmp.eq.s32.totalorder %s11, 0
    %p31 = por %p29, %p30
    %p32 = scmp.ne.s32.totalorder %s21, %s24
    %p33 = scmp.eq.s32.totalorder %s16, 1
    %p34 = por %p32, %p33
    %p35 = scmp.ne.s32.totalorder %s24, %s25
    %p36 = scmp.eq.s32.totalorder %s16, 0
    %p37 = por %p35, %p36
    %p38 = scmp.ne.s32.totalorder %s24, %s25
    %p39 = scmp.eq.s32.totalorder %s17, 1
    %p40 = por %p38, %p39
    %p42 = scmp.ne.s32.totalorder %s25, %s41
    %p43 = scmp.eq.s32.totalorder %s17, 0
    %p44 = por %p42, %p43
    %s46 = sadd.s32 %s45, 1
    %p49 = scmp.eq.s32.totalorder %s11, 1
    %p50 = scmp.ne.s32.totalorder %s45, %s47
    %p51 = scmp.eq.s32.totalorder %s11, 0
    %p52 = por %p50, %p51
    %p53 = scmp.ne.s32.totalorder %s45, %s47
    %p54 = scmp.eq.s32.totalorder %s16, 1
    %p55 = por %p53, %p54
    %p56 = scmp.ne.s32.totalorder %s47, %s48
    %p57 = scmp.eq.s32.totalorder %s16, 0
    %p58 = por %p56, %p57
    %p59 = scmp.ne.s32.totalorder %s47, %s48
    %p60 = scmp.eq.s32.totalorder %s17, 1
    %p61 = por %p59, %p60
    %p63 = scmp.ne.s32.totalorder %s48, %s62
    %p64 = scmp.eq.s32.totalorder %s17, 0
    %p65 = por %p63, %p64
    %s67 = sadd.s32 %s66, 1
    %p70 = scmp.eq.s32.totalorder %s11, 1
    %p71 = scmp.ne.s32.totalorder %s66, %s68
    %p72 = scmp.eq.s32.totalorder %s11, 0
    %p73 = por %p71, %p72
    %p74 = scmp.ne.s32.totalorder %s66, %s68
    %p75 = scmp.eq.s32.totalorder %s16, 1
    %p76 = por %p74, %p75
    %p77 = scmp.ne.s32.totalorder %s68, %s69
    %p78 = scmp.eq.s32.totalorder %s16, 0
    %p79 = por %p77, %p78
    %p80 = scmp.ne.s32.totalorder %s68, %s69
    %p81 = scmp.eq.s32.totalorder %s17, 1
    %p82 = por %p80, %p81
    %p84 = scmp.ne.s32.totalorder %s69, %s83
    %p85 = scmp.eq.s32.totalorder %s17, 0
    %p86 = por %p84, %p85
    %s88 = sadd.s32 %s87, 1
    %p91 = scmp.eq.s32.totalorder %s11, 1
    %p92 = scmp.ne.s32.totalorder %s87, %s89
    %p93 = scmp.eq.s32.totalorder %s11, 0
    %p94 = por %p92, %p93
    %p95 = scmp.ne.s32.totalorder %s87, %s89
    %p96 = scmp.eq.s32.totalorder %s16, 1
    %p97 = por %p95, %p96
    %p98 = scmp.ne.s32.totalorder %s89, %s90
    %p99 = scmp.eq.s32.totalorder %s16, 0
    %p100 = por %p98, %p99
    %p101 = scmp.ne.s32.totalorder %s89, %s90
    %p102 = scmp.eq.s32.totalorder %s17, 1
    %p103 = por %p101, %p102
    %p105 = scmp.ne.s32.totalorder %s90, %s104
    %p106 = scmp.eq.s32.totalorder %s17, 0
    %p107 = por %p105, %p106
    %s109 = sadd.s32 %s108, 1
    %p112 = scmp.eq.s32.totalorder %s11, 1
    %p113 = scmp.ne.s32.totalorder %s108, %s110
    %p114 = scmp.eq.s32.totalorder %s11, 0
    %p115 = por %p113, %p114
    %p116 = scmp.ne.s32.totalorder %s108, %s110
    %p117 = scmp.eq.s32.totalorder %s16, 1
    %p118 = por %p116, %p117
    %p119 = scmp.ne.s32.totalorder %s110, %s111
    %p120 = scmp.eq.s32.totalorder %s16, 0
    %p121 = por %p119, %p120
    %p122 = scmp.ne.s32.totalorder %s110, %s111
    %p123 = scmp.eq.s32.totalorder %s17, 1
    %p124 = por %p122, %p123
    %p126 = scmp.ne.s32.totalorder %s111, %s125
    %p127 = scmp.eq.s32.totalorder %s17, 0
    %p128 = por %p126, %p127
    %s129 = ssub.s32 %s11, %s18
    %p130 = scmp.eq.s32.totalorder %s129, 0
    %s132 = sadd.s32 %s131, 1
    %s133 = scalar_select %p130, %s131, %s132
    %p136 = pneg %p130
    %p137 = scmp.eq.s32.totalorder %s11, 1
    %p138 = por %p136, %p137
    %p139 = scmp.ne.s32.totalorder %s131, %s134
    %p140 = scmp.eq.s32.totalorder %s11, 0
    %p141 = por %p139, %p140
    %p142 = scmp.ne.s32.totalorder %s131, %s134
    %p143 = scmp.eq.s32.totalorder %s16, 1
    %p144 = por %p142, %p143
    %p145 = scmp.ne.s32.totalorder %s134, %s135
    %p146 = scmp.eq.s32.totalorder %s16, 0
    %p147 = por %p145, %p146
    %p148 = scmp.ne.s32.totalorder %s134, %s135
    %p149 = scmp.eq.s32.totalorder %s17, 1
    %p150 = por %p148, %p149
    %p152 = scmp.ne.s32.totalorder %s135, %s151
    %p153 = scmp.eq.s32.totalorder %s17, 0
    %p154 = por %p152, %p153
    %p155 = scmp.le.s32.totalorder 1, %s11
    %p156 = scmp.lt.s32.totalorder %s11, 3
    %p157 = pnand %p155, %p156
    %p158 = pneg %p157
    // Predicated region
    $region9: #{tpu_custom_call.1} parent=5 // pred_check
      _
    $region10: #{tpu_custom_call.1} parent=5 // pred_check_branch
      %160 = sbr.rel (%p157) target = $region12
    $region11: #{tpu_custom_call.1} parent=5 // pred_region
      %s161 = ssub.s32 %s11, 1
      // Predicated region
      $region13: #{tpu_custom_call.1} parent=11 // pred_check
        %p162 = pneg %p58
      $region14: #{tpu_custom_call.1} parent=11 // pred_check_branch
        %164 = sbr.rel (%p162) target = $region16
      $region15: #{tpu_custom_call.1} parent=11 // pred_region
        _
      $region16: #{tpu_custom_call.1} parent=11 // pred_fallthru
        _
      // Predicated region
      $region17: #{tpu_custom_call.1} parent=11 // pred_check
        %p165 = pneg %p79
      $region18: #{tpu_custom_call.1} parent=11 // pred_check_branch
        %167 = sbr.rel (%p165) target = $region20
      $region19: #{tpu_custom_call.1} parent=11 // pred_region
        _
      $region20: #{tpu_custom_call.1} parent=11 // pred_fallthru
        _
      // Predicated region
      $region21: #{tpu_custom_call.1} parent=11 // pred_check
        %p168 = pneg %p100
      $region22: #{tpu_custom_call.1} parent=11 // pred_check_branch
        %170 = sbr.rel (%p168) target = $region24
      $region23: #{tpu_custom_call.1} parent=11 // pred_region
        _
      $region24: #{tpu_custom_call.1} parent=11 // pred_fallthru
        _
      // Predicated region
      $region25: #{tpu_custom_call.1} parent=11 // pred_check
        %p171 = pneg %p121
      $region26: #{tpu_custom_call.1} parent=11 // pred_check_branch
        %173 = sbr.rel (%p171) target = $region28
      $region27: #{tpu_custom_call.1} parent=11 // pred_region
        _
      $region28: #{tpu_custom_call.1} parent=11 // pred_fallthru
        _
    $region12: #{tpu_custom_call.1} parent=5 // pred_fallthru
      _
    %p174 = scmp.lt.s32.totalorder %s11, 2
    // Predicated region
    $region29: #{tpu_custom_call.1} parent=5 // pred_check
      %p175 = pneg %p174
    $region30: #{tpu_custom_call.1} parent=5 // pred_check_branch
      %177 = sbr.rel (%p175) target = $region32
    $region31: #{tpu_custom_call.1} parent=5 // pred_region
      // Predicated region
      $region33: #{tpu_custom_call.1} parent=31 // pred_check
        %p178 = pneg %p31
      $region34: #{tpu_custom_call.1} parent=31 // pred_check_branch
        %180 = sbr.rel (%p178) target = $region36
      $region35: #{tpu_custom_call.1} parent=31 // pred_region
        %p181 = scmp.lt.s32.totalorder %s11, 1
        %s182 = scalar_select %p181, %s11, 1
        %s183 = smul.addr %s182, 32
        %s184 = smul.addr %s183, 8
        %s185 = scalar_lea.vmem %s0, %s184
      $region36: #{tpu_custom_call.1} parent=31 // pred_fallthru
        _
    $region32: #{tpu_custom_call.1} parent=5 // pred_fallthru
      _
    %p186 = scmp.le.s32.totalorder 1, %s11
    %p187 = scmp.lt.s32.totalorder %s11, 3
    %p188 = pnand %p186, %p187
    %p189 = pneg %p188
    // Predicated region
    $region37: #{tpu_custom_call.1} parent=5 // pred_check
      _
    $region38: #{tpu_custom_call.1} parent=5 // pred_check_branch
      %191 = sbr.rel (%p188) target = $region40
    $region39: #{tpu_custom_call.1} parent=5 // pred_region
      %s192 = ssub.s32 %s11, 1
      %p193 = scmp.lt.s32.totalorder %s16, 1
      %s194 = scalar_select %p193, %s16, 1
      %s195 = smul.addr %s194, 32
      %s196 = smul.addr %s195, 8
      %s197 = scalar_lea.vmem %s0, %s196
      %p198 = pneg %p37
      %p199 = pneg %p34
      %p200 = pneg %p58
      %p201 = pneg %p55
      %p202 = pneg %p79
      %p203 = pneg %p76
      %p204 = pneg %p100
      %p205 = pneg %p97
      %p206 = pneg %p121
      %p207 = pneg %p118
      %p208 = pneg %p147
      %p209 = pneg %p144
      %p210 = scmp.lt.s32.totalorder %s16, 1
      %s211 = scalar_select %p210, %s16, 1
      %s212 = smul.addr %s211, 3
      %s213 = smul.addr %s212, 4
      %s214 = scalar_lea.vmem %s5, %s213
      %p215 = scmp.lt.s32.totalorder %s16, 1
      %s216 = scalar_select %p215, %s16, 1
      %s217 = smul.addr %s216, 32
      %s218 = smul.addr %s217, 8
      %s219 = scalar_lea.vmem %s0, %s218
      %p220 = scmp.lt.s32.totalorder %s16, 1
      %s221 = scalar_select %p220, %s16, 1
      %s222 = smul.addr %s221, 3
      %s223 = smul.addr %s222, 4
      %s224 = scalar_lea.vmem %s5, %s223
      %v225 = vld [vmem:[%s219] sm:$0xff]
      %v226 = vld [vmem:[%s219 + $0x8] sm:$0xff]
      %v227 = vld [vmem:[%s219 + $0x10] sm:$0xff]
      %v228 = vld [vmem:[%s219 + $0x18] sm:$0xff]
      %v229 = vld [vmem:[%s219 + $0x20] sm:$0xff]
      %v230 = vld [vmem:[%s219 + $0x28] sm:$0xff]
      %v231 = vld [vmem:[%s219 + $0x30] sm:$0xff]
      %v232 = vld [vmem:[%s219 + $0x38] sm:$0xff]
      %v233 = vld [vmem:[%s219 + $0x40] sm:$0xff]
      %v234 = vld [vmem:[%s219 + $0x48] sm:$0xff]
      %v235 = vld [vmem:[%s219 + $0x50] sm:$0xff]
      %v236 = vld [vmem:[%s219 + $0x58] sm:$0xff]
      %v237 = vld [vmem:[%s219 + $0x60] sm:$0xff]
      %v238 = vld [vmem:[%s219 + $0x68] sm:$0xff]
      %v239 = vld [vmem:[%s219 + $0x70] sm:$0xff]
      %v240 = vld [vmem:[%s219 + $0x78] sm:$0xff]
      %v241 = vld [vmem:[%s219 + $0x80] sm:$0xff]
      %v242 = vld [vmem:[%s219 + $0x88] sm:$0xff]
      %v243 = vld [vmem:[%s219 + $0x90] sm:$0xff]
      %v244 = vld [vmem:[%s219 + $0x98] sm:$0xff]
      %v245 = vld [vmem:[%s219 + $0xa0] sm:$0xff]
      %v246 = vld [vmem:[%s219 + $0xa8] sm:$0xff]
      %v247 = vld [vmem:[%s219 + $0xb0] sm:$0xff]
      %v248 = vld [vmem:[%s219 + $0xb8] sm:$0xff]
      %v249 = vld [vmem:[%s219 + $0xc0] sm:$0xff]
      %v250 = vld [vmem:[%s219 + $0xc8] sm:$0xff]
      %v251 = vld [vmem:[%s219 + $0xd0] sm:$0xff]
      %v252 = vld [vmem:[%s219 + $0xd8] sm:$0xff]
      %v253 = vld [vmem:[%s219 + $0xe0] sm:$0xff]
      %v254 = vld [vmem:[%s219 + $0xe8] sm:$0xff]
      %v255 = vld [vmem:[%s219 + $0xf0] sm:$0xff]
      %v256 = vld [vmem:[%s219 + $0xf8] sm:$0xff]
      %v257 = vld [vmem:[%s1] sm:$0xf]
      %vm258 = vcmask 31744
      %v260 = vsel %vm258, %v225, 0
      %v263 = vsel %vm258, %v226, 0
      %v266 = vsel %vm258, %v227, 0
      %v269 = vsel %vm258, %v228, 0
      %v272 = vsel %vm258, %v229, 0
      %v275 = vsel %vm258, %v230, 0
      %v278 = vsel %vm258, %v231, 0
      %v281 = vsel %vm258, %v232, 0
      %v284 = vsel %vm258, %v233, 0
      %v287 = vsel %vm258, %v234, 0
      %v290 = vsel %vm258, %v235, 0
      %v293 = vsel %vm258, %v236, 0
      %v296 = vsel %vm258, %v237, 0
      %v299 = vsel %vm258, %v238, 0
      %v302 = vsel %vm258, %v239, 0
      %v305 = vsel %vm258, %v240, 0
      %v308 = vsel %vm258, %v241, 0
      %v311 = vsel %vm258, %v242, 0
      %v314 = vsel %vm258, %v243, 0
      %v317 = vsel %vm258, %v244, 0
      %v320 = vsel %vm258, %v245, 0
      %v323 = vsel %vm258, %v246, 0
      %v326 = vsel %vm258, %v247, 0
      %v329 = vsel %vm258, %v248, 0
      %v332 = vsel %vm258, %v249, 0
      %v335 = vsel %vm258, %v250, 0
      %v338 = vsel %vm258, %v251, 0
      %v341 = vsel %vm258, %v252, 0
      %v344 = vsel %vm258, %v253, 0
      %v347 = vsel %vm258, %v254, 0
      %v350 = vsel %vm258, %v255, 0
      %v353 = vsel %vm258, %v256, 0
      %vm355 = vcmask 1043456
      %v357 = vsel %vm355, %v257, 0
      %359 = vmatprep.subr.mxu0 0.0
      %360 = vmatpush1.msra.mxu0 %v357
      %361 = vmatprep.subr.mxu0 0.0
      %362 = vmatpush1.msra.mxu0 0.0
      %363 = vmatprep.subr.mxu0 0.0
      %364 = vmatpush1.msra.mxu0 0.0
      %365 = vmatprep.subr.mxu0 0.0
      %366 = vmatpush1.msra.mxu0 0.0
      %367 = vmatprep.subr.mxu0 0.0
      %368 = vmatpush1.msra.mxu0 0.0
      %369 = vmatprep.subr.mxu0 0.0
      %370 = vmatpush1.msra.mxu0 0.0
      %371 = vmatprep.subr.mxu0 0.0
      %372 = vmatpush1.msra.mxu0 0.0
      %373 = vmatprep.subr.mxu0 0.0
      %374 = vmatpush1.msra.mxu0 0.0
      %375 = vmatprep.subr.mxu0 0.0
      %376 = vmatpush1.msra.mxu0 0.0
      %377 = vmatprep.subr.mxu0 0.0
      %378 = vmatpush1.msra.mxu0 0.0
      %379 = vmatprep.subr.mxu0 0.0
      %380 = vmatpush1.msra.mxu0 0.0
      %381 = vmatprep.subr.mxu0 0.0
      %382 = vmatpush1.msra.mxu0 0.0
      %383 = vmatprep.subr.mxu0 0.0
      %384 = vmatpush1.msra.mxu0 0.0
      %385 = vmatprep.subr.mxu0 0.0
      %386 = vmatpush1.msra.mxu0 0.0
      %387 = vmatprep.subr.mxu0 0.0
      %388 = vmatpush1.msra.mxu0 0.0
      %389 = vmatprep.subr.mxu0 0.0
      %390 = vmatpush1.msra.mxu0 0.0
      %391 = vmatprep.subr.mxu0 0.0
      %392 = vmatpush1.msra.mxu0 0.0
      %393 = vmatprep.subr.mxu0 0.0
      %394 = vmatpush1.msra.mxu0 0.0
      %395 = vmatprep.subr.mxu0 0.0
      %396 = vmatpush1.msra.mxu0 0.0
      %397 = vmatprep.subr.mxu0 0.0
      %398 = vmatpush1.msra.mxu0 0.0
      %399 = vmatprep.subr.mxu0 0.0
      %400 = vmatpush1.msra.mxu0 0.0
      %401 = vmatprep.subr.mxu0 0.0
      %402 = vmatpush1.msra.mxu0 0.0
      %403 = vmatprep.subr.mxu0 0.0
      %404 = vmatpush1.msra.mxu0 0.0
      %405 = vmatprep.subr.mxu0 0.0
      %406 = vmatpush1.msra.mxu0 0.0
      %407 = vmatprep.subr.mxu0 0.0
      %408 = vmatpush1.msra.mxu0 0.0
      %409 = vmatprep.subr.mxu0 0.0
      %410 = vmatpush1.msra.mxu0 0.0
      %411 = vmatprep.subr.mxu0 0.0
      %412 = vmatpush1.msra.mxu0 0.0
      %413 = vmatprep.subr.mxu0 0.0
      %414 = vmatpush1.msra.mxu0 0.0
      %415 = vmatprep.subr.mxu0 0.0
      %416 = vmatpush1.msra.mxu0 0.0
      %417 = vmatprep.subr.mxu0 0.0
      %418 = vmatpush1.msra.mxu0 0.0
      %419 = vmatprep.subr.mxu0 0.0
      %420 = vmatpush1.msra.mxu0 0.0
      %421 = vmatprep.subr.mxu0 0.0
      %422 = vmatpush1.msra.mxu0 0.0
      %423 = vmatprep.mubr.f32.mxu0 0.0
      %424 = vmatmul.mubr.f32.gmra.mrb[0].mxu0 %v260
      %v425 = vpop.f32.mrb[0].mxu0
      %v426 = vadd.f32 0.0, %v425
      %v427 = vpop.f32.mrb[0].mxu0
      %428 = vmatprep.mubr.f32.mxu0 0.0
      %429 = vmatmul.mubr.f32.gmra.mrb[0].mxu0 %v263
      %v430 = vpop.f32.mrb[0].mxu0
      %v431 = vadd.f32 0.0, %v430
      %v432 = vpop.f32.mrb[0].mxu0
      %433 = vmatprep.mubr.f32.mxu0 0.0
      %434 = vmatmul.mubr.f32.gmra.mrb[0].mxu0 %v266
      %v435 = vpop.f32.mrb[0].mxu0
      %v436 = vadd.f32 0.0, %v435
      %v437 = vpop.f32.mrb[0].mxu0
      %438 = vmatprep.mubr.f32.mxu0 0.0
      %439 = vmatmul.mubr.f32.gmra.mrb[0].mxu0 %v269
      %v440 = vpop.f32.mrb[0].mxu0
      %v441 = vadd.f32 0.0, %v440
      %v442 = vpop.f32.mrb[0].mxu0
      %443 = vmatprep.mubr.f32.mxu0 0.0
      %444 = vmatmul.mubr.f32.gmra.mrb[0].mxu0 %v272
      %v445 = vpop.f32.mrb[0].mxu0
      %v446 = vadd.f32 0.0, %v445
      %v447 = vpop.f32.mrb[0].mxu0
      %448 = vmatprep.mubr.f32.mxu0 0.0
      %449 = vmatmul.mubr.f32.gmra.mrb[0].mxu0 %v275
      %v450 = vpop.f32.mrb[0].mxu0
      %v451 = vadd.f32 0.0, %v450
      %v452 = vpop.f32.mrb[0].mxu0
      %453 = vmatprep.mubr.f32.mxu0 0.0
      %454 = vmatmul.mubr.f32.gmra.mrb[0].mxu0 %v278
      %v455 = vpop.f32.mrb[0].mxu0
      %v456 = vadd.f32 0.0, %v455
      %v457 = vpop.f32.mrb[0].mxu0
      %458 = vmatprep.mubr.f32.mxu0 0.0
      %459 = vmatmul.mubr.f32.gmra.mrb[0].mxu0 %v281
      %v460 = vpop.f32.mrb[0].mxu0
      %v461 = vadd.f32 0.0, %v460
      %v462 = vpop.f32.mrb[0].mxu0
      %463 = vmatprep.mubr.f32.mxu0 0.0
      %464 = vmatmul.mubr.f32.gmra.mrb[0].mxu0 %v284
      %v465 = vpop.f32.mrb[0].mxu0
      %v466 = vadd.f32 0.0, %v465
      %v467 = vpop.f32.mrb[0].mxu0
      %468 = vmatprep.mubr.f32.mxu0 0.0
      %469 = vmatmul.mubr.f32.gmra.mrb[0].mxu0 %v287
      %v470 = vpop.f32.mrb[0].mxu0
      %v471 = vadd.f32 0.0, %v470
      %v472 = vpop.f32.mrb[0].mxu0
      %473 = vmatprep.mubr.f32.mxu0 0.0
      %474 = vmatmul.mubr.f32.gmra.mrb[0].mxu0 %v290
      %v475 = vpop.f32.mrb[0].mxu0
      %v476 = vadd.f32 0.0, %v475
      %v477 = vpop.f32.mrb[0].mxu0
      %478 = vmatprep.mubr.f32.mxu0 0.0
      %479 = vmatmul.mubr.f32.gmra.mrb[0].mxu0 %v293
      %v480 = vpop.f32.mrb[0].mxu0
      %v481 = vadd.f32 0.0, %v480
      %v482 = vpop.f32.mrb[0].mxu0
      %483 = vmatprep.mubr.f32.mxu0 0.0
      %484 = vmatmul.mubr.f32.gmra.mrb[0].mxu0 %v296
      %v485 = vpop.f32.mrb[0].mxu0
      %v486 = vadd.f32 0.0, %v485
      %v487 = vpop.f32.mrb[0].mxu0
      %488 = vmatprep.mubr.f32.mxu0 0.0
      %489 = vmatmul.mubr.f32.gmra.mrb[0].mxu0 %v299
      %v490 = vpop.f32.mrb[0].mxu0
      %v491 = vadd.f32 0.0, %v490
      %v492 = vpop.f32.mrb[0].mxu0
      %493 = vmatprep.mubr.f32.mxu0 0.0
      %494 = vmatmul.mubr.f32.gmra.mrb[0].mxu0 %v302
      %v495 = vpop.f32.mrb[0].mxu0
      %v496 = vadd.f32 0.0, %v495
      %v497 = vpop.f32.mrb[0].mxu0
      %498 = vmatprep.mubr.f32.mxu0 0.0
      %499 = vmatmul.mubr.f32.gmra.mrb[0].mxu0 %v305
      %v500 = vpop.f32.mrb[0].mxu0
      %v501 = vadd.f32 0.0, %v500
      %v502 = vpop.f32.mrb[0].mxu0
      %503 = vmatprep.mubr.f32.mxu0 0.0
      %504 = vmatmul.mubr.f32.gmra.mrb[0].mxu0 %v308
      %v505 = vpop.f32.mrb[0].mxu0
      %v506 = vadd.f32 0.0, %v505
      %v507 = vpop.f32.mrb[0].mxu0
      %508 = vmatprep.mubr.f32.mxu0 0.0
      %509 = vmatmul.mubr.f32.gmra.mrb[0].mxu0 %v311
      %v510 = vpop.f32.mrb[0].mxu0
      %v511 = vadd.f32 0.0, %v510
      %v512 = vpop.f32.mrb[0].mxu0
      %513 = vmatprep.mubr.f32.mxu0 0.0
      %514 = vmatmul.mubr.f32.gmra.mrb[0].mxu0 %v314
      %v515 = vpop.f32.mrb[0].mxu0
      %v516 = vadd.f32 0.0, %v515
      %v517 = vpop.f32.mrb[0].mxu0
      %518 = vmatprep.mubr.f32.mxu0 0.0
      %519 = vmatmul.mubr.f32.gmra.mrb[0].mxu0 %v317
      %v520 = vpop.f32.mrb[0].mxu0
      %v521 = vadd.f32 0.0, %v520
      %v522 = vpop.f32.mrb[0].mxu0
      %523 = vmatprep.mubr.f32.mxu0 0.0
      %524 = vmatmul.mubr.f32.gmra.mrb[0].mxu0 %v320
      %v525 = vpop.f32.mrb[0].mxu0
      %v526 = vadd.f32 0.0, %v525
      %v527 = vpop.f32.mrb[0].mxu0
      %528 = vmatprep.mubr.f32.mxu0 0.0
      %529 = vmatmul.mubr.f32.gmra.mrb[0].mxu0 %v323
      %v530 = vpop.f32.mrb[0].mxu0
      %v531 = vadd.f32 0.0, %v530
      %v532 = vpop.f32.mrb[0].mxu0
      %533 = vmatprep.mubr.f32.mxu0 0.0
      %534 = vmatmul.mubr.f32.gmra.mrb[0].mxu0 %v326
      %v535 = vpop.f32.mrb[0].mxu0
      %v536 = vadd.f32 0.0, %v535
      %v537 = vpop.f32.mrb[0].mxu0
      %538 = vmatprep.mubr.f32.mxu0 0.0
      %539 = vmatmul.mubr.f32.gmra.mrb[0].mxu0 %v329
      %v540 = vpop.f32.mrb[0].mxu0
      %v541 = vadd.f32 0.0, %v540
      %v542 = vpop.f32.mrb[0].mxu0
      %543 = vmatprep.mubr.f32.mxu0 0.0
      %544 = vmatmul.mubr.f32.gmra.mrb[0].mxu0 %v332
      %v545 = vpop.f32.mrb[0].mxu0
      %v546 = vadd.f32 0.0, %v545
      %v547 = vpop.f32.mrb[0].mxu0
      %548 = vmatprep.mubr.f32.mxu0 0.0
      %549 = vmatmul.mubr.f32.gmra.mrb[0].mxu0 %v335
      %v550 = vpop.f32.mrb[0].mxu0
      %v551 = vadd.f32 0.0, %v550
      %v552 = vpop.f32.mrb[0].mxu0
      %553 = vmatprep.mubr.f32.mxu0 0.0
      %554 = vmatmul.mubr.f32.gmra.mrb[0].mxu0 %v338
      %v555 = vpop.f32.mrb[0].mxu0
      %v556 = vadd.f32 0.0, %v555
      %v557 = vpop.f32.mrb[0].mxu0
      %558 = vmatprep.mubr.f32.mxu0 0.0
      %559 = vmatmul.mubr.f32.gmra.mrb[0].mxu0 %v341
      %v560 = vpop.f32.mrb[0].mxu0
      %v561 = vadd.f32 0.0, %v560
      %v562 = vpop.f32.mrb[0].mxu0
      %563 = vmatprep.mubr.f32.mxu0 0.0
      %564 = vmatmul.mubr.f32.gmra.mrb[0].mxu0 %v344
      %v565 = vpop.f32.mrb[0].mxu0
      %v566 = vadd.f32 0.0, %v565
      %v567 = vpop.f32.mrb[0].mxu0
      %568 = vmatprep.mubr.f32.mxu0 0.0
      %569 = vmatmul.mubr.f32.gmra.mrb[0].mxu0 %v347
      %v570 = vpop.f32.mrb[0].mxu0
      %v571 = vadd.f32 0.0, %v570
      %v572 = vpop.f32.mrb[0].mxu0
      %573 = vmatprep.mubr.f32.mxu0 0.0
      %574 = vmatmul.mubr.f32.gmra.mrb[0].mxu0 %v350
      %v575 = vpop.f32.mrb[0].mxu0
      %v576 = vadd.f32 0.0, %v575
      %v577 = vpop.f32.mrb[0].mxu0
      %578 = vmatprep.mubr.f32.mxu0 0.0
      %579 = vmatmul.mubr.f32.gmra.mrb[0].mxu0 %v353
      %v580 = vpop.f32.mrb[0].mxu0
      %v581 = vadd.f32 0.0, %v580
      %v582 = vpop.f32.mrb[0].mxu0
      %583 = vdwg.mxu0
      %v584 = vmax.f32 %v426, %v466
      %v585 = vmax.f32 %v431, %v471
      %v586 = vmax.f32 %v436, %v476
      %v587 = vmax.f32 %v441, %v481
      %v588 = vmax.f32 %v446, %v486
      %v589 = vmax.f32 %v451, %v491
      %v590 = vmax.f32 %v456, %v496
      %v591 = vmax.f32 %v461, %v501
      %v592 = vmax.f32 %v506, %v546
      %v593 = vmax.f32 %v511, %v551
      %v594 = vmax.f32 %v516, %v556
      %v595 = vmax.f32 %v521, %v561
      %v596 = vmax.f32 %v526, %v566
      %v597 = vmax.f32 %v531, %v571
      %v598 = vmax.f32 %v536, %v576
      %v599 = vmax.f32 %v541, %v581
      %v600 = vmax.f32 %v584, %v592
      %v601 = vmax.f32 %v585, %v593
      %v602 = vmax.f32 %v586, %v594
      %v603 = vmax.f32 %v587, %v595
      %v604 = vmax.f32 %v588, %v596
      %v605 = vmax.f32 %v589, %v597
      %v606 = vmax.f32 %v590, %v598
      %v607 = vmax.f32 %v591, %v599
      %v608 = vld [vmem:[%s2] sm:$0x1]
      %v610 = vlaneseq
      %v611 = vshrl.u32 %v610, 7
      %v612 = vsub.s32 0, %v611
      %v613 = vrot.slane %v608, %v612
      %v615 = vadd.f32 %v600, %v613
      %v616 = vadd.f32 %v601, %v613
      %v617 = vadd.f32 %v602, %v613
      %v618 = vadd.f32 %v603, %v613
      %v619 = vadd.f32 %v604, %v613
      %v620 = vadd.f32 %v605, %v613
      %v621 = vadd.f32 %v606, %v613
      %v622 = vadd.f32 %v607, %v613
      %v623 = vmax.f32 %v615, 0.0
      %v624 = vmax.f32 %v616, 0.0
      %v625 = vmax.f32 %v617, 0.0
      %v626 = vmax.f32 %v618, 0.0
      %v627 = vmax.f32 %v619, 0.0
      %v628 = vmax.f32 %v620, 0.0
      %v629 = vmax.f32 %v621, 0.0
      %v630 = vmax.f32 %v622, 0.0
      %vm631 = vcmask 64512
      %632 = vst.msk [vmem:[#allocation2] sm:$0xff] %vm631, %v623
      %633 = vst.msk [vmem:[#allocation2 + $0x8] sm:$0xff] %vm631, %v624
      %634 = vst.msk [vmem:[#allocation2 + $0x10] sm:$0xff] %vm631, %v625
      %635 = vst.msk [vmem:[#allocation2 + $0x18] sm:$0xff] %vm631, %v626
      %636 = vst.msk [vmem:[#allocation2 + $0x20] sm:$0xff] %vm631, %v627
      %637 = vst.msk [vmem:[#allocation2 + $0x28] sm:$0xff] %vm631, %v628
      %638 = vst.msk [vmem:[#allocation2 + $0x30] sm:$0xff] %vm631, %v629
      %639 = vst.msk [vmem:[#allocation2 + $0x38] sm:$0xff] %vm631, %v630
      %640 = vst.msk [vmem:[#allocation2 + $0x40] sm:$0xff] %vm631, 0.0
      %v641 = vld [vmem:[#allocation2] sm:$0xff]
      %v642 = vld [vmem:[#allocation2 + $0x8] sm:$0xff]
      %v643 = vld [vmem:[#allocation2 + $0x10] sm:$0xff]
      %v644 = vld [vmem:[#allocation2 + $0x18] sm:$0xff]
      %v645 = vld [vmem:[#allocation2 + $0x20] sm:$0xff]
      %v646 = vld [vmem:[#allocation2 + $0x28] sm:$0xff]
      %v647 = vld [vmem:[%s3] sm:$0xff]
      %v648 = vld [vmem:[#allocation2 + $0x1] sm:$0xff]
      %v649 = vld [vmem:[#allocation2 + $0x9] sm:$0xff]
      %v650 = vld [vmem:[#allocation2 + $0x11] sm:$0xff]
      %v651 = vld [vmem:[#allocation2 + $0x19] sm:$0xff]
      %v652 = vld [vmem:[#allocation2 + $0x21] sm:$0xff]
      %v653 = vld [vmem:[#allocation2 + $0x29] sm:$0xff]
      %v654 = vld [vmem:[%s3 + $0x8] sm:$0xff]
      %v656 = vsel %vm631, %v648, 0
      %v659 = vsel %vm631, %v649, 0
      %v662 = vsel %vm631, %v650, 0
      %v665 = vsel %vm631, %v651, 0
      %v668 = vsel %vm631, %v652, 0
      %v671 = vsel %vm631, %v653, 0
      %673 = vmatprep.subr.mxu0 0.0
      %674 = vmatpush1.msra.mxu0 %v654
      %675 = vmatprep.subr.mxu0 0.0
      %676 = vmatpush1.msra.mxu0 0.0
      %677 = vmatprep.subr.mxu0 0.0
      %678 = vmatpush1.msra.mxu0 0.0
      %679 = vmatprep.subr.mxu0 0.0
      %680 = vmatpush1.msra.mxu0 0.0
      %681 = vmatprep.subr.mxu0 0.0
      %682 = vmatpush1.msra.mxu0 0.0
      %683 = vmatprep.subr.mxu0 0.0
      %684 = vmatpush1.msra.mxu0 0.0
      %685 = vmatprep.subr.mxu0 0.0
      %686 = vmatpush1.msra.mxu0 0.0
      %687 = vmatprep.subr.mxu0 0.0
      %688 = vmatpush1.msra.mxu0 0.0
      %689 = vmatprep.subr.mxu0 0.0
      %690 = vmatpush1.msra.mxu0 0.0
      %691 = vmatprep.subr.mxu0 0.0
      %692 = vmatpush1.msra.mxu0 0.0
      %693 = vmatprep.subr.mxu0 0.0
      %694 = vmatpush1.msra.mxu0 0.0
      %695 = vmatprep.subr.mxu0 0.0
      %696 = vmatpush1.msra.mxu0 0.0
      %697 = vmatprep.subr.mxu0 0.0
      %698 = vmatpush1.msra.mxu0 0.0
      %699 = vmatprep.subr.mxu0 0.0
      %700 = vmatpush1.msra.mxu0 0.0
      %701 = vmatprep.subr.mxu0 0.0
      %702 = vmatpush1.msra.mxu0 0.0
      %703 = vmatprep.subr.mxu0 0.0
      %704 = vmatpush1.msra.mxu0 0.0
      %705 = vmatprep.subr.mxu0 0.0
      %706 = vmatpush1.msra.mxu0 0.0
      %707 = vmatprep.subr.mxu0 0.0
      %708 = vmatpush1.msra.mxu0 0.0
      %709 = vmatprep.subr.mxu0 0.0
      %710 = vmatpush1.msra.mxu0 0.0
      %711 = vmatprep.subr.mxu0 0.0
      %712 = vmatpush1.msra.mxu0 0.0
      %713 = vmatprep.subr.mxu0 0.0
      %714 = vmatpush1.msra.mxu0 0.0
      %715 = vmatprep.subr.mxu0 0.0
      %716 = vmatpush1.msra.mxu0 0.0
      %717 = vmatprep.subr.mxu0 0.0
      %718 = vmatpush1.msra.mxu0 0.0
      %719 = vmatprep.subr.mxu0 0.0
      %720 = vmatpush1.msra.mxu0 0.0
      %721 = vmatprep.subr.mxu0 0.0
      %722 = vmatpush1.msra.mxu0 0.0
      %723 = vmatprep.subr.mxu0 0.0
      %724 = vmatpush1.msra.mxu0 0.0
      %725 = vmatprep.subr.mxu0 0.0
      %726 = vmatpush1.msra.mxu0 0.0
      %727 = vmatprep.subr.mxu0 0.0
      %728 = vmatpush1.msra.mxu0 0.0
      %729 = vmatprep.subr.mxu0 0.0
      %730 = vmatpush1.msra.mxu0 0.0
      %731 = vmatprep.subr.mxu0 0.0
      %732 = vmatpush1.msra.mxu0 0.0
      %733 = vmatprep.subr.mxu0 0.0
      %734 = vmatpush1.msra.mxu0 0.0
      %735 = vmatprep.subr.mxu0 0.0
      %736 = vmatpush1.msra.mxu0 0.0
      %737 = vmatprep.mubr.f32.mxu0 0.0
      %738 = vmatmul.mubr.f32.gmra.mrb[0].mxu0 %v656
      %v739 = vpop.f32.mrb[0].mxu0
      %v740 = vadd.f32 0.0, %v739
      %v741 = vpop.f32.mrb[0].mxu0
      %742 = vmatprep.mubr.f32.mxu0 0.0
      %743 = vmatmul.mubr.f32.gmra.mrb[0].mxu0 %v659
      %v744 = vpop.f32.mrb[0].mxu0
      %v745 = vadd.f32 0.0, %v744
      %v746 = vpop.f32.mrb[0].mxu0
      %747 = vmatprep.mubr.f32.mxu0 0.0
      %748 = vmatmul.mubr.f32.gmra.mrb[0].mxu0 %v662
      %v749 = vpop.f32.mrb[0].mxu0
      %v750 = vadd.f32 0.0, %v749
      %v751 = vpop.f32.mrb[0].mxu0
      %752 = vmatprep.mubr.f32.mxu0 0.0
      %753 = vmatmul.mubr.f32.gmra.mrb[0].mxu0 %v665
      %v754 = vpop.f32.mrb[0].mxu0
      %v755 = vadd.f32 0.0, %v754
      %v756 = vpop.f32.mrb[0].mxu0
      %757 = vmatprep.mubr.f32.mxu0 0.0
      %758 = vmatmul.mubr.f32.gmra.mrb[0].mxu0 %v668
      %v759 = vpop.f32.mrb[0].mxu0
      %v760 = vadd.f32 0.0, %v759
      %v761 = vpop.f32.mrb[0].mxu0
      %762 = vmatprep.mubr.f32.mxu0 0.0
      %763 = vmatmul.mubr.f32.gmra.mrb[0].mxu0 %v671
      %v764 = vpop.f32.mrb[0].mxu0
      %v765 = vadd.f32 0.0, %v764
      %v766 = vpop.f32.mrb[0].mxu0
      %767 = vdwg.mxu0
      %v769 = vsel %vm631, %v641, 0
      %v772 = vsel %vm631, %v642, 0
      %v775 = vsel %vm631, %v643, 0
      %v778 = vsel %vm631, %v644, 0
      %v781 = vsel %vm631, %v645, 0
      %v784 = vsel %vm631, %v646, 0
      %786 = vmatprep.subr.mxu0 0.0
      %787 = vmatpush1.msra.mxu0 %v647
      %788 = vmatprep.subr.mxu0 0.0
      %789 = vmatpush1.msra.mxu0 0.0
      %790 = vmatprep.subr.mxu0 0.0
      %791 = vmatpush1.msra.mxu0 0.0
      %792 = vmatprep.subr.mxu0 0.0
      %793 = vmatpush1.msra.mxu0 0.0
      %794 = vmatprep.subr.mxu0 0.0
      %795 = vmatpush1.msra.mxu0 0.0
      %796 = vmatprep.subr.mxu0 0.0
      %797 = vmatpush1.msra.mxu0 0.0
      %798 = vmatprep.subr.mxu0 0.0
      %799 = vmatpush1.msra.mxu0 0.0
      %800 = vmatprep.subr.mxu0 0.0
      %801 = vmatpush1.msra.mxu0 0.0
      %802 = vmatprep.subr.mxu0 0.0
      %803 = vmatpush1.msra.mxu0 0.0
      %804 = vmatprep.subr.mxu0 0.0
      %805 = vmatpush1.msra.mxu0 0.0
      %806 = vmatprep.subr.mxu0 0.0
      %807 = vmatpush1.msra.mxu0 0.0
      %808 = vmatprep.subr.mxu0 0.0
      %809 = vmatpush1.msra.mxu0 0.0
      %810 = vmatprep.subr.mxu0 0.0
      %811 = vmatpush1.msra.mxu0 0.0
      %812 = vmatprep.subr.mxu0 0.0
      %813 = vmatpush1.msra.mxu0 0.0
      %814 = vmatprep.subr.mxu0 0.0
      %815 = vmatpush1.msra.mxu0 0.0
      %816 = vmatprep.subr.mxu0 0.0
      %817 = vmatpush1.msra.mxu0 0.0
      %818 = vmatprep.subr.mxu0 0.0
      %819 = vmatpush1.msra.mxu0 0.0
      %820 = vmatprep.subr.mxu0 0.0
      %821 = vmatpush1.msra.mxu0 0.0
      %822 = vmatprep.subr.mxu0 0.0
      %823 = vmatpush1.msra.mxu0 0.0
      %824 = vmatprep.subr.mxu0 0.0
      %825 = vmatpush1.msra.mxu0 0.0
      %826 = vmatprep.subr.mxu0 0.0
      %827 = vmatpush1.msra.mxu0 0.0
      %828 = vmatprep.subr.mxu0 0.0
      %829 = vmatpush1.msra.mxu0 0.0
      %830 = vmatprep.subr.mxu0 0.0
      %831 = vmatpush1.msra.mxu0 0.0
      %832 = vmatprep.subr.mxu0 0.0
      %833 = vmatpush1.msra.mxu0 0.0
      %834 = vmatprep.subr.mxu0 0.0
      %835 = vmatpush1.msra.mxu0 0.0
      %836 = vmatprep.subr.mxu0 0.0
      %837 = vmatpush1.msra.mxu0 0.0
      %838 = vmatprep.subr.mxu0 0.0
      %839 = vmatpush1.msra.mxu0 0.0
      %840 = vmatprep.subr.mxu0 0.0
      %841 = vmatpush1.msra.mxu0 0.0
      %842 = vmatprep.subr.mxu0 0.0
      %843 = vmatpush1.msra.mxu0 0.0
      %844 = vmatprep.subr.mxu0 0.0
      %845 = vmatpush1.msra.mxu0 0.0
      %846 = vmatprep.subr.mxu0 0.0
      %847 = vmatpush1.msra.mxu0 0.0
      %848 = vmatprep.subr.mxu0 0.0
      %849 = vmatpush1.msra.mxu0 0.0
      %850 = vmatprep.mubr.f32.mxu0 0.0
      %851 = vmatmul.mubr.f32.gmra.mrb[0].mxu0 %v769
      %v852 = vpop.f32.mrb[0].mxu0
      %v853 = vadd.f32 %v740, %v852
      %v854 = vpop.f32.mrb[0].mxu0
      %855 = vmatprep.mubr.f32.mxu0 0.0
      %856 = vmatmul.mubr.f32.gmra.mrb[0].mxu0 %v772
      %v857 = vpop.f32.mrb[0].mxu0
      %v858 = vadd.f32 %v745, %v857
      %v859 = vpop.f32.mrb[0].mxu0
      %860 = vmatprep.mubr.f32.mxu0 0.0
      %861 = vmatmul.mubr.f32.gmra.mrb[0].mxu0 %v775
      %v862 = vpop.f32.mrb[0].mxu0
      %v863 = vadd.f32 %v750, %v862
      %v864 = vpop.f32.mrb[0].mxu0
      %865 = vmatprep.mubr.f32.mxu0 0.0
      %866 = vmatmul.mubr.f32.gmra.mrb[0].mxu0 %v778
      %v867 = vpop.f32.mrb[0].mxu0
      %v868 = vadd.f32 %v755, %v867
      %v869 = vpop.f32.mrb[0].mxu0
      %870 = vmatprep.mubr.f32.mxu0 0.0
      %871 = vmatmul.mubr.f32.gmra.mrb[0].mxu0 %v781
      %v872 = vpop.f32.mrb[0].mxu0
      %v873 = vadd.f32 %v760, %v872
      %v874 = vpop.f32.mrb[0].mxu0
      %875 = vmatprep.mubr.f32.mxu0 0.0
      %876 = vmatmul.mubr.f32.gmra.mrb[0].mxu0 %v784
      %v877 = vpop.f32.mrb[0].mxu0
      %v878 = vadd.f32 %v765, %v877
      %v879 = vpop.f32.mrb[0].mxu0
      %880 = vdwg.mxu0
      %v881 = vld [vmem:[#allocation2 + $0x2] sm:$0xff]
      %v882 = vld [vmem:[#allocation2 + $0xa] sm:$0xff]
      %v883 = vld [vmem:[#allocation2 + $0x12] sm:$0xff]
      %v884 = vld [vmem:[#allocation2 + $0x1a] sm:$0xff]
      %v885 = vld [vmem:[#allocation2 + $0x22] sm:$0xff]
      %v886 = vld [vmem:[#allocation2 + $0x2a] sm:$0xff]
      %v887 = vld [vmem:[%s3 + $0x10] sm:$0xff]
      %v889 = vsel %vm631, %v881, 0
      %v892 = vsel %vm631, %v882, 0
      %v895 = vsel %vm631, %v883, 0
      %v898 = vsel %vm631, %v884, 0
      %v901 = vsel %vm631, %v885, 0
      %v904 = vsel %vm631, %v886, 0
      %906 = vmatprep.subr.mxu0 0.0
      %907 = vmatpush1.msra.mxu0 %v887
      %908 = vmatprep.subr.mxu0 0.0
      %909 = vmatpush1.msra.mxu0 0.0
      %910 = vmatprep.subr.mxu0 0.0
      %911 = vmatpush1.msra.mxu0 0.0
      %912 = vmatprep.subr.mxu0 0.0
      %913 = vmatpush1.msra.mxu0 0.0
      %914 = vmatprep.subr.mxu0 0.0
      %915 = vmatpush1.msra.mxu0 0.0
      %916 = vmatprep.subr.mxu0 0.0
      %917 = vmatpush1.msra.mxu0 0.0
      %918 = vmatprep.subr.mxu0 0.0
      %919 = vmatpush1.msra.mxu0 0.0
      %920 = vmatprep.subr.mxu0 0.0
      %921 = vmatpush1.msra.mxu0 0.0
      %922 = vmatprep.subr.mxu0 0.0
      %923 = vmatpush1.msra.mxu0 0.0
      %924 = vmatprep.subr.mxu0 0.0
      %925 = vmatpush1.msra.mxu0 0.0
      %926 = vmatprep.subr.mxu0 0.0
      %927 = vmatpush1.msra.mxu0 0.0
      %928 = vmatprep.subr.mxu0 0.0
      %929 = vmatpush1.msra.mxu0 0.0
      %930 = vmatprep.subr.mxu0 0.0
      %931 = vmatpush1.msra.mxu0 0.0
      %932 = vmatprep.subr.mxu0 0.0
      %933 = vmatpush1.msra.mxu0 0.0
      %934 = vmatprep.subr.mxu0 0.0
      %935 = vmatpush1.msra.mxu0 0.0
      %936 = vmatprep.subr.mxu0 0.0
      %937 = vmatpush1.msra.mxu0 0.0
      %938 = vmatprep.subr.mxu0 0.0
      %939 = vmatpush1.msra.mxu0 0.0
      %940 = vmatprep.subr.mxu0 0.0
      %941 = vmatpush1.msra.mxu0 0.0
      %942 = vmatprep.subr.mxu0 0.0
      %943 = vmatpush1.msra.mxu0 0.0
      %944 = vmatprep.subr.mxu0 0.0
      %945 = vmatpush1.msra.mxu0 0.0
      %946 = vmatprep.subr.mxu0 0.0
      %947 = vmatpush1.msra.mxu0 0.0
      %948 = vmatprep.subr.mxu0 0.0
      %949 = vmatpush1.msra.mxu0 0.0
      %950 = vmatprep.subr.mxu0 0.0
      %951 = vmatpush1.msra.mxu0 0.0
      %952 = vmatprep.subr.mxu0 0.0
      %953 = vmatpush1.msra.mxu0 0.0
      %954 = vmatprep.subr.mxu0 0.0
      %955 = vmatpush1.msra.mxu0 0.0
      %956 = vmatprep.subr.mxu0 0.0
      %957 = vmatpush1.msra.mxu0 0.0
      %958 = vmatprep.subr.mxu0 0.0
      %959 = vmatpush1.msra.mxu0 0.0
      %960 = vmatprep.subr.mxu0 0.0
      %961 = vmatpush1.msra.mxu0 0.0
      %962 = vmatprep.subr.mxu0 0.0
      %963 = vmatpush1.msra.mxu0 0.0
      %964 = vmatprep.subr.mxu0 0.0
      %965 = vmatpush1.msra.mxu0 0.0
      %966 = vmatprep.subr.mxu0 0.0
      %967 = vmatpush1.msra.mxu0 0.0
      %968 = vmatprep.subr.mxu0 0.0
      %969 = vmatpush1.msra.mxu0 0.0
      %970 = vmatprep.mubr.f32.mxu0 0.0
      %971 = vmatmul.mubr.f32.gmra.mrb[0].mxu0 %v889
      %v972 = vpop.f32.mrb[0].mxu0
      %v973 = vadd.f32 0.0, %v972
      %v974 = vpop.f32.mrb[0].mxu0
      %975 = vmatprep.mubr.f32.mxu0 0.0
      %976 = vmatmul.mubr.f32.gmra.mrb[0].mxu0 %v892
      %v977 = vpop.f32.mrb[0].mxu0
      %v978 = vadd.f32 0.0, %v977
      %v979 = vpop.f32.mrb[0].mxu0
      %980 = vmatprep.mubr.f32.mxu0 0.0
      %981 = vmatmul.mubr.f32.gmra.mrb[0].mxu0 %v895
      %v982 = vpop.f32.mrb[0].mxu0
      %v983 = vadd.f32 0.0, %v982
      %v984 = vpop.f32.mrb[0].mxu0
      %985 = vmatprep.mubr.f32.mxu0 0.0
      %986 = vmatmul.mubr.f32.gmra.mrb[0].mxu0 %v898
      %v987 = vpop.f32.mrb[0].mxu0
      %v988 = vadd.f32 0.0, %v987
      %v989 = vpop.f32.mrb[0].mxu0
      %990 = vmatprep.mubr.f32.mxu0 0.0
      %991 = vmatmul.mubr.f32.gmra.mrb[0].mxu0 %v901
      %v992 = vpop.f32.mrb[0].mxu0
      %v993 = vadd.f32 0.0, %v992
      %v994 = vpop.f32.mrb[0].mxu0
      %995 = vmatprep.mubr.f32.mxu0 0.0
      %996 = vmatmul.mubr.f32.gmra.mrb[0].mxu0 %v904
      %v997 = vpop.f32.mrb[0].mxu0
      %v998 = vadd.f32 0.0, %v997
      %v999 = vpop.f32.mrb[0].mxu0
      %1000 = vdwg.mxu0
      %v1001 = vadd.f32 %v853, %v973
      %v1002 = vadd.f32 %v858, %v978
      %v1003 = vadd.f32 %v863, %v983
      %v1004 = vadd.f32 %v868, %v988
      %v1005 = vadd.f32 %v873, %v993
      %v1006 = vadd.f32 %v878, %v998
      %v1007 = vld [vmem:[#allocation2 + $0x8] sm:$0xff]
      %v1008 = vld [vmem:[#allocation2 + $0x10] sm:$0xff]
      %v1009 = vld [vmem:[#allocation2 + $0x18] sm:$0xff]
      %v1010 = vld [vmem:[#allocation2 + $0x20] sm:$0xff]
      %v1011 = vld [vmem:[#allocation2 + $0x28] sm:$0xff]
      %v1012 = vld [vmem:[#allocation2 + $0x30] sm:$0xff]
      %v1013 = vld [vmem:[%s3 + $0x18] sm:$0xff]
      %v1015 = vsel %vm631, %v1007, 0
      %v1018 = vsel %vm631, %v1008, 0
      %v1021 = vsel %vm631, %v1009, 0
      %v1024 = vsel %vm631, %v1010, 0
      %v1027 = vsel %vm631, %v1011, 0
      %v1030 = vsel %vm631, %v1012, 0
      %1032 = vmatprep.subr.mxu0 0.0
      %1033 = vmatpush1.msra.mxu0 %v1013
      %1034 = vmatprep.subr.mxu0 0.0
      %1035 = vmatpush1.msra.mxu0 0.0
      %1036 = vmatprep.subr.mxu0 0.0
      %1037 = vmatpush1.msra.mxu0 0.0
      %1038 = vmatprep.subr.mxu0 0.0
      %1039 = vmatpush1.msra.mxu0 0.0
      %1040 = vmatprep.subr.mxu0 0.0
      %1041 = vmatpush1.msra.mxu0 0.0
      %1042 = vmatprep.subr.mxu0 0.0
      %1043 = vmatpush1.msra.mxu0 0.0
      %1044 = vmatprep.subr.mxu0 0.0
      %1045 = vmatpush1.msra.mxu0 0.0
      %1046 = vmatprep.subr.mxu0 0.0
      %1047 = vmatpush1.msra.mxu0 0.0
      %1048 = vmatprep.subr.mxu0 0.0
      %1049 = vmatpush1.msra.mxu0 0.0
      %1050 = vmatprep.subr.mxu0 0.0
      %1051 = vmatpush1.msra.mxu0 0.0
      %1052 = vmatprep.subr.mxu0 0.0
      %1053 = vmatpush1.msra.mxu0 0.0
      %1054 = vmatprep.subr.mxu0 0.0
      %1055 = vmatpush1.msra.mxu0 0.0
      %1056 = vmatprep.subr.mxu0 0.0
      %1057 = vmatpush1.msra.mxu0 0.0
      %1058 = vmatprep.subr.mxu0 0.0
      %1059 = vmatpush1.msra.mxu0 0.0
      %1060 = vmatprep.subr.mxu0 0.0
      %1061 = vmatpush1.msra.mxu0 0.0
      %1062 = vmatprep.subr.mxu0 0.0
      %1063 = vmatpush1.msra.mxu0 0.0
      %1064 = vmatprep.subr.mxu0 0.0
      %1065 = vmatpush1.msra.mxu0 0.0
      %1066 = vmatprep.subr.mxu0 0.0
      %1067 = vmatpush1.msra.mxu0 0.0
      %1068 = vmatprep.subr.mxu0 0.0
      %1069 = vmatpush1.msra.mxu0 0.0
      %1070 = vmatprep.subr.mxu0 0.0
      %1071 = vmatpush1.msra.mxu0 0.0
      %1072 = vmatprep.subr.mxu0 0.0
      %1073 = vmatpush1.msra.mxu0 0.0
      %1074 = vmatprep.subr.mxu0 0.0
      %1075 = vmatpush1.msra.mxu0 0.0
      %1076 = vmatprep.subr.mxu0 0.0
      %1077 = vmatpush1.msra.mxu0 0.0
      %1078 = vmatprep.subr.mxu0 0.0
      %1079 = vmatpush1.msra.mxu0 0.0
      %1080 = vmatprep.subr.mxu0 0.0
      %1081 = vmatpush1.msra.mxu0 0.0
      %1082 = vmatprep.subr.mxu0 0.0
      %1083 = vmatpush1.msra.mxu0 0.0
      %1084 = vmatprep.subr.mxu0 0.0
      %1085 = vmatpush1.msra.mxu0 0.0
      %1086 = vmatprep.subr.mxu0 0.0
      %1087 = vmatpush1.msra.mxu0 0.0
      %1088 = vmatprep.subr.mxu0 0.0
      %1089 = vmatpush1.msra.mxu0 0.0
      %1090 = vmatprep.subr.mxu0 0.0
      %1091 = vmatpush1.msra.mxu0 0.0
      %1092 = vmatprep.subr.mxu0 0.0
      %1093 = vmatpush1.msra.mxu0 0.0
      %1094 = vmatprep.subr.mxu0 0.0
      %1095 = vmatpush1.msra.mxu0 0.0
      %1096 = vmatprep.mubr.f32.mxu0 0.0
      %1097 = vmatmul.mubr.f32.gmra.mrb[0].mxu0 %v1015
      %v1098 = vpop.f32.mrb[0].mxu0
      %v1099 = vadd.f32 0.0, %v1098
      %v1100 = vpop.f32.mrb[0].mxu0
      %1101 = vmatprep.mubr.f32.mxu0 0.0
      %1102 = vmatmul.mubr.f32.gmra.mrb[0].mxu0 %v1018
      %v1103 = vpop.f32.mrb[0].mxu0
      %v1104 = vadd.f32 0.0, %v1103
      %v1105 = vpop.f32.mrb[0].mxu0
      %1106 = vmatprep.mubr.f32.mxu0 0.0
      %1107 = vmatmul.mubr.f32.gmra.mrb[0].mxu0 %v1021
      %v1108 = vpop.f32.mrb[0].mxu0
      %v1109 = vadd.f32 0.0, %v1108
      %v1110 = vpop.f32.mrb[0].mxu0
      %1111 = vmatprep.mubr.f32.mxu0 0.0
      %1112 = vmatmul.mubr.f32.gmra.mrb[0].mxu0 %v1024
      %v1113 = vpop.f32.mrb[0].mxu0
      %v1114 = vadd.f32 0.0, %v1113
      %v1115 = vpop.f32.mrb[0].mxu0
      %1116 = vmatprep.mubr.f32.mxu0 0.0
      %1117 = vmatmul.mubr.f32.gmra.mrb[0].mxu0 %v1027
      %v1118 = vpop.f32.mrb[0].mxu0
      %v1119 = vadd.f32 0.0, %v1118
      %v1120 = vpop.f32.mrb[0].mxu0
      %1121 = vmatprep.mubr.f32.mxu0 0.0
      %1122 = vmatmul.mubr.f32.gmra.mrb[0].mxu0 %v1030
      %v1123 = vpop.f32.mrb[0].mxu0
      %v1124 = vadd.f32 0.0, %v1123
      %v1125 = vpop.f32.mrb[0].mxu0
      %1126 = vdwg.mxu0
      %v1127 = vadd.f32 %v1001, %v1099
      %v1128 = vadd.f32 %v1002, %v1104
      %v1129 = vadd.f32 %v1003, %v1109
      %v1130 = vadd.f32 %v1004, %v1114
      %v1131 = vadd.f32 %v1005, %v1119
      %v1132 = vadd.f32 %v1006, %v1124
      %v1133 = vld [vmem:[#allocation2 + $0x9] sm:$0xff]
      %v1134 = vld [vmem:[#allocation2 + $0x11] sm:$0xff]
      %v1135 = vld [vmem:[#allocation2 + $0x19] sm:$0xff]
      %v1136 = vld [vmem:[#allocation2 + $0x21] sm:$0xff]
      %v1137 = vld [vmem:[#allocation2 + $0x29] sm:$0xff]
      %v1138 = vld [vmem:[#allocation2 + $0x31] sm:$0xff]
      %v1139 = vld [vmem:[%s3 + $0x20] sm:$0xff]
      %v1141 = vsel %vm631, %v1133, 0
      %v1144 = vsel %vm631, %v1134, 0
      %v1147 = vsel %vm631, %v1135, 0
      %v1150 = vsel %vm631, %v1136, 0
      %v1153 = vsel %vm631, %v1137, 0
      %v1156 = vsel %vm631, %v1138, 0
      %1158 = vmatprep.subr.mxu0 0.0
      %1159 = vmatpush1.msra.mxu0 %v1139
      %1160 = vmatprep.subr.mxu0 0.0
      %1161 = vmatpush1.msra.mxu0 0.0
      %1162 = vmatprep.subr.mxu0 0.0
      %1163 = vmatpush1.msra.mxu0 0.0
      %1164 = vmatprep.subr.mxu0 0.0
      %1165 = vmatpush1.msra.mxu0 0.0
      %1166 = vmatprep.subr.mxu0 0.0
      %1167 = vmatpush1.msra.mxu0 0.0
      %1168 = vmatprep.subr.mxu0 0.0
      %1169 = vmatpush1.msra.mxu0 0.0
      %1170 = vmatprep.subr.mxu0 0.0
      %1171 = vmatpush1.msra.mxu0 0.0
      %1172 = vmatprep.subr.mxu0 0.0
      %1173 = vmatpush1.msra.mxu0 0.0
      %1174 = vmatprep.subr.mxu0 0.0
      %1175 = vmatpush1.msra.mxu0 0.0
      %1176 = vmatprep.subr.mxu0 0.0
      %1177 = vmatpush1.msra.mxu0 0.0
      %1178 = vmatprep.subr.mxu0 0.0
      %1179 = vmatpush1.msra.mxu0 0.0
      %1180 = vmatprep.subr.mxu0 0.0
      %1181 = vmatpush1.msra.mxu0 0.0
      %1182 = vmatprep.subr.mxu0 0.0
      %1183 = vmatpush1.msra.mxu0 0.0
      %1184 = vmatprep.subr.mxu0 0.0
      %1185 = vmatpush1.msra.mxu0 0.0
      %1186 = vmatprep.subr.mxu0 0.0
      %1187 = vmatpush1.msra.mxu0 0.0
      %1188 = vmatprep.subr.mxu0 0.0
      %1189 = vmatpush1.msra.mxu0 0.0
      %1190 = vmatprep.subr.mxu0 0.0
      %1191 = vmatpush1.msra.mxu0 0.0
      %1192 = vmatprep.subr.mxu0 0.0
      %1193 = vmatpush1.msra.mxu0 0.0
      %1194 = vmatprep.subr.mxu0 0.0
      %1195 = vmatpush1.msra.mxu0 0.0
      %1196 = vmatprep.subr.mxu0 0.0
      %1197 = vmatpush1.msra.mxu0 0.0
      %1198 = vmatprep.subr.mxu0 0.0
      %1199 = vmatpush1.msra.mxu0 0.0
      %1200 = vmatprep.subr.mxu0 0.0
      %1201 = vmatpush1.msra.mxu0 0.0
      %1202 = vmatprep.subr.mxu0 0.0
      %1203 = vmatpush1.msra.mxu0 0.0
      %1204 = vmatprep.subr.mxu0 0.0
      %1205 = vmatpush1.msra.mxu0 0.0
      %1206 = vmatprep.subr.mxu0 0.0
      %1207 = vmatpush1.msra.mxu0 0.0
      %1208 = vmatprep.subr.mxu0 0.0
      %1209 = vmatpush1.msra.mxu0 0.0
      %1210 = vmatprep.subr.mxu0 0.0
      %1211 = vmatpush1.msra.mxu0 0.0
      %1212 = vmatprep.subr.mxu0 0.0
      %1213 = vmatpush1.msra.mxu0 0.0
      %1214 = vmatprep.subr.mxu0 0.0
      %1215 = vmatpush1.msra.mxu0 0.0
      %1216 = vmatprep.subr.mxu0 0.0
      %1217 = vmatpush1.msra.mxu0 0.0
      %1218 = vmatprep.subr.mxu0 0.0
      %1219 = vmatpush1.msra.mxu0 0.0
      %1220 = vmatprep.subr.mxu0 0.0
      %1221 = vmatpush1.msra.mxu0 0.0
      %1222 = vmatprep.mubr.f32.mxu0 0.0
      %1223 = vmatmul.mubr.f32.gmra.mrb[0].mxu0 %v1141
      %v1224 = vpop.f32.mrb[0].mxu0
      %v1225 = vadd.f32 0.0, %v1224
      %v1226 = vpop.f32.mrb[0].mxu0
      %1227 = vmatprep.mubr.f32.mxu0 0.0
      %1228 = vmatmul.mubr.f32.gmra.mrb[0].mxu0 %v1144
      %v1229 = vpop.f32.mrb[0].mxu0
      %v1230 = vadd.f32 0.0, %v1229
      %v1231 = vpop.f32.mrb[0].mxu0
      %1232 = vmatprep.mubr.f32.mxu0 0.0
      %1233 = vmatmul.mubr.f32.gmra.mrb[0].mxu0 %v1147
      %v1234 = vpop.f32.mrb[0].mxu0
      %v1235 = vadd.f32 0.0, %v1234
      %v1236 = vpop.f32.mrb[0].mxu0
      %1237 = vmatprep.mubr.f32.mxu0 0.0
      %1238 = vmatmul.mubr.f32.gmra.mrb[0].mxu0 %v1150
      %v1239 = vpop.f32.mrb[0].mxu0
      %v1240 = vadd.f32 0.0, %v1239
      %v1241 = vpop.f32.mrb[0].mxu0
      %1242 = vmatprep.mubr.f32.mxu0 0.0
      %1243 = vmatmul.mubr.f32.gmra.mrb[0].mxu0 %v1153
      %v1244 = vpop.f32.mrb[0].mxu0
      %v1245 = vadd.f32 0.0, %v1244
      %v1246 = vpop.f32.mrb[0].mxu0
      %1247 = vmatprep.mubr.f32.mxu0 0.0
      %1248 = vmatmul.mubr.f32.gmra.mrb[0].mxu0 %v1156
      %v1249 = vpop.f32.mrb[0].mxu0
      %v1250 = vadd.f32 0.0, %v1249
      %v1251 = vpop.f32.mrb[0].mxu0
      %1252 = vdwg.mxu0
      %v1253 = vadd.f32 %v1127, %v1225
      %v1254 = vadd.f32 %v1128, %v1230
      %v1255 = vadd.f32 %v1129, %v1235
      %v1256 = vadd.f32 %v1130, %v1240
      %v1257 = vadd.f32 %v1131, %v1245
      %v1258 = vadd.f32 %v1132, %v1250
      %v1259 = vld [vmem:[#allocation2 + $0xa] sm:$0xff]
      %v1260 = vld [vmem:[#allocation2 + $0x12] sm:$0xff]
      %v1261 = vld [vmem:[#allocation2 + $0x1a] sm:$0xff]
      %v1262 = vld [vmem:[#allocation2 + $0x22] sm:$0xff]
      %v1263 = vld [vmem:[#allocation2 + $0x2a] sm:$0xff]
      %v1264 = vld [vmem:[#allocation2 + $0x32] sm:$0xff]
      %v1265 = vld [vmem:[%s3 + $0x28] sm:$0xff]
      %v1267 = vsel %vm631, %v1259, 0
      %v1270 = vsel %vm631, %v1260, 0
      %v1273 = vsel %vm631, %v1261, 0
      %v1276 = vsel %vm631, %v1262, 0
      %v1279 = vsel %vm631, %v1263, 0
      %v1282 = vsel %vm631, %v1264, 0
      %1284 = vmatprep.subr.mxu0 0.0
      %1285 = vmatpush1.msra.mxu0 %v1265
      %1286 = vmatprep.subr.mxu0 0.0
      %1287 = vmatpush1.msra.mxu0 0.0
      %1288 = vmatprep.subr.mxu0 0.0
      %1289 = vmatpush1.msra.mxu0 0.0
      %1290 = vmatprep.subr.mxu0 0.0
      %1291 = vmatpush1.msra.mxu0 0.0
      %1292 = vmatprep.subr.mxu0 0.0
      %1293 = vmatpush1.msra.mxu0 0.0
      %1294 = vmatprep.subr.mxu0 0.0
      %1295 = vmatpush1.msra.mxu0 0.0
      %1296 = vmatprep.subr.mxu0 0.0
      %1297 = vmatpush1.msra.mxu0 0.0
      %1298 = vmatprep.subr.mxu0 0.0
      %1299 = vmatpush1.msra.mxu0 0.0
      %1300 = vmatprep.subr.mxu0 0.0
      %1301 = vmatpush1.msra.mxu0 0.0
      %1302 = vmatprep.subr.mxu0 0.0
      %1303 = vmatpush1.msra.mxu0 0.0
      %1304 = vmatprep.subr.mxu0 0.0
      %1305 = vmatpush1.msra.mxu0 0.0
      %1306 = vmatprep.subr.mxu0 0.0
      %1307 = vmatpush1.msra.mxu0 0.0
      %1308 = vmatprep.subr.mxu0 0.0
      %1309 = vmatpush1.msra.mxu0 0.0
      %1310 = vmatprep.subr.mxu0 0.0
      %1311 = vmatpush1.msra.mxu0 0.0
      %1312 = vmatprep.subr.mxu0 0.0
      %1313 = vmatpush1.msra.mxu0 0.0
      %1314 = vmatprep.subr.mxu0 0.0
      %1315 = vmatpush1.msra.mxu0 0.0
      %1316 = vmatprep.subr.mxu0 0.0
      %1317 = vmatpush1.msra.mxu0 0.0
      %1318 = vmatprep.subr.mxu0 0.0
      %1319 = vmatpush1.msra.mxu0 0.0
      %1320 = vmatprep.subr.mxu0 0.0
      %1321 = vmatpush1.msra.mxu0 0.0
      %1322 = vmatprep.subr.mxu0 0.0
      %1323 = vmatpush1.msra.mxu0 0.0
      %1324 = vmatprep.subr.mxu0 0.0
      %1325 = vmatpush1.msra.mxu0 0.0
      %1326 = vmatprep.subr.mxu0 0.0
      %1327 = vmatpush1.msra.mxu0 0.0
      %1328 = vmatprep.subr.mxu0 0.0
      %1329 = vmatpush1.msra.mxu0 0.0
      %1330 = vmatprep.subr.mxu0 0.0
      %1331 = vmatpush1.msra.mxu0 0.0
      %1332 = vmatprep.subr.mxu0 0.0
      %1333 = vmatpush1.msra.mxu0 0.0
      %1334 = vmatprep.subr.mxu0 0.0
      %1335 = vmatpush1.msra.mxu0 0.0
      %1336 = vmatprep.subr.mxu0 0.0
      %1337 = vmatpush1.msra.mxu0 0.0
      %1338 = vmatprep.subr.mxu0 0.0
      %1339 = vmatpush1.msra.mxu0 0.0
      %1340 = vmatprep.subr.mxu0 0.0
      %1341 = vmatpush1.msra.mxu0 0.0
      %1342 = vmatprep.subr.mxu0 0.0
      %1343 = vmatpush1.msra.mxu0 0.0
      %1344 = vmatprep.subr.mxu0 0.0
      %1345 = vmatpush1.msra.mxu0 0.0
      %1346 = vmatprep.subr.mxu0 0.0
      %1347 = vmatpush1.msra.mxu0 0.0
      %1348 = vmatprep.mubr.f32.mxu0 0.0
      %1349 = vmatmul.mubr.f32.gmra.mrb[0].mxu0 %v1267
      %v1350 = vpop.f32.mrb[0].mxu0
      %v1351 = vadd.f32 0.0, %v1350
      %v1352 = vpop.f32.mrb[0].mxu0
      %1353 = vmatprep.mubr.f32.mxu0 0.0
      %1354 = vmatmul.mubr.f32.gmra.mrb[0].mxu0 %v1270
      %v1355 = vpop.f32.mrb[0].mxu0
      %v1356 = vadd.f32 0.0, %v1355
      %v1357 = vpop.f32.mrb[0].mxu0
      %1358 = vmatprep.mubr.f32.mxu0 0.0
      %1359 = vmatmul.mubr.f32.gmra.mrb[0].mxu0 %v1273
      %v1360 = vpop.f32.mrb[0].mxu0
      %v1361 = vadd.f32 0.0, %v1360
      %v1362 = vpop.f32.mrb[0].mxu0
      %1363 = vmatprep.mubr.f32.mxu0 0.0
      %1364 = vmatmul.mubr.f32.gmra.mrb[0].mxu0 %v1276
      %v1365 = vpop.f32.mrb[0].mxu0
      %v1366 = vadd.f32 0.0, %v1365
      %v1367 = vpop.f32.mrb[0].mxu0
      %1368 = vmatprep.mubr.f32.mxu0 0.0
      %1369 = vmatmul.mubr.f32.gmra.mrb[0].mxu0 %v1279
      %v1370 = vpop.f32.mrb[0].mxu0
      %v1371 = vadd.f32 0.0, %v1370
      %v1372 = vpop.f32.mrb[0].mxu0
      %1373 = vmatprep.mubr.f32.mxu0 0.0
      %1374 = vmatmul.mubr.f32.gmra.mrb[0].mxu0 %v1282
      %v1375 = vpop.f32.mrb[0].mxu0
      %v1376 = vadd.f32 0.0, %v1375
      %v1377 = vpop.f32.mrb[0].mxu0
      %1378 = vdwg.mxu0
      %v1379 = vadd.f32 %v1253, %v1351
      %v1380 = vadd.f32 %v1254, %v1356
      %v1381 = vadd.f32 %v1255, %v1361
      %v1382 = vadd.f32 %v1256, %v1366
      %v1383 = vadd.f32 %v1257, %v1371
      %v1384 = vadd.f32 %v1258, %v1376
      %v1385 = vld [vmem:[#allocation2 + $0x10] sm:$0xff]
      %v1386 = vld [vmem:[#allocation2 + $0x18] sm:$0xff]
      %v1387 = vld [vmem:[#allocation2 + $0x20] sm:$0xff]
      %v1388 = vld [vmem:[#allocation2 + $0x28] sm:$0xff]
      %v1389 = vld [vmem:[#allocation2 + $0x30] sm:$0xff]
      %v1390 = vld [vmem:[#allocation2 + $0x38] sm:$0xff]
      %v1391 = vld [vmem:[%s3 + $0x30] sm:$0xff]
      %v1393 = vsel %vm631, %v1385, 0
      %v1396 = vsel %vm631, %v1386, 0
      %v1399 = vsel %vm631, %v1387, 0
      %v1402 = vsel %vm631, %v1388, 0
      %v1405 = vsel %vm631, %v1389, 0
      %v1408 = vsel %vm631, %v1390, 0
      %1410 = vmatprep.subr.mxu0 0.0
      %1411 = vmatpush1.msra.mxu0 %v1391
      %1412 = vmatprep.subr.mxu0 0.0
      %1413 = vmatpush1.msra.mxu0 0.0
      %1414 = vmatprep.subr.mxu0 0.0
      %1415 = vmatpush1.msra.mxu0 0.0
      %1416 = vmatprep.subr.mxu0 0.0
      %1417 = vmatpush1.msra.mxu0 0.0
      %1418 = vmatprep.subr.mxu0 0.0
      %1419 = vmatpush1.msra.mxu0 0.0
      %1420 = vmatprep.subr.mxu0 0.0
      %1421 = vmatpush1.msra.mxu0 0.0
      %1422 = vmatprep.subr.mxu0 0.0
      %1423 = vmatpush1.msra.mxu0 0.0
      %1424 = vmatprep.subr.mxu0 0.0
      %1425 = vmatpush1.msra.mxu0 0.0
      %1426 = vmatprep.subr.mxu0 0.0
      %1427 = vmatpush1.msra.mxu0 0.0
      %1428 = vmatprep.subr.mxu0 0.0
      %1429 = vmatpush1.msra.mxu0 0.0
      %1430 = vmatprep.subr.mxu0 0.0
      %1431 = vmatpush1.msra.mxu0 0.0
      %1432 = vmatprep.subr.mxu0 0.0
      %1433 = vmatpush1.msra.mxu0 0.0
      %1434 = vmatprep.subr.mxu0 0.0
      %1435 = vmatpush1.msra.mxu0 0.0
      %1436 = vmatprep.subr.mxu0 0.0
      %1437 = vmatpush1.msra.mxu0 0.0
      %1438 = vmatprep.subr.mxu0 0.0
      %1439 = vmatpush1.msra.mxu0 0.0
      %1440 = vmatprep.subr.mxu0 0.0
      %1441 = vmatpush1.msra.mxu0 0.0
      %1442 = vmatprep.subr.mxu0 0.0
      %1443 = vmatpush1.msra.mxu0 0.0
      %1444 = vmatprep.subr.mxu0 0.0
      %1445 = vmatpush1.msra.mxu0 0.0
      %1446 = vmatprep.subr.mxu0 0.0
      %1447 = vmatpush1.msra.mxu0 0.0
      %1448 = vmatprep.subr.mxu0 0.0
      %1449 = vmatpush1.msra.mxu0 0.0
      %1450 = vmatprep.subr.mxu0 0.0
      %1451 = vmatpush1.msra.mxu0 0.0
      %1452 = vmatprep.subr.mxu0 0.0
      %1453 = vmatpush1.msra.mxu0 0.0
      %1454 = vmatprep.subr.mxu0 0.0
      %1455 = vmatpush1.msra.mxu0 0.0
      %1456 = vmatprep.subr.mxu0 0.0
      %1457 = vmatpush1.msra.mxu0 0.0
      %1458 = vmatprep.subr.mxu0 0.0
      %1459 = vmatpush1.msra.mxu0 0.0
      %1460 = vmatprep.subr.mxu0 0.0
      %1461 = vmatpush1.msra.mxu0 0.0
      %1462 = vmatprep.subr.mxu0 0.0
      %1463 = vmatpush1.msra.mxu0 0.0
      %1464 = vmatprep.subr.mxu0 0.0
      %1465 = vmatpush1.msra.mxu0 0.0
      %1466 = vmatprep.subr.mxu0 0.0
      %1467 = vmatpush1.msra.mxu0 0.0
      %1468 = vmatprep.subr.mxu0 0.0
      %1469 = vmatpush1.msra.mxu0 0.0
      %1470 = vmatprep.subr.mxu0 0.0
      %1471 = vmatpush1.msra.mxu0 0.0
      %1472 = vmatprep.subr.mxu0 0.0
      %1473 = vmatpush1.msra.mxu0 0.0
      %1474 = vmatprep.mubr.f32.mxu0 0.0
      %1475 = vmatmul.mubr.f32.gmra.mrb[0].mxu0 %v1393
      %v1476 = vpop.f32.mrb[0].mxu0
      %v1477 = vadd.f32 0.0, %v1476
      %v1478 = vpop.f32.mrb[0].mxu0
      %1479 = vmatprep.mubr.f32.mxu0 0.0
      %1480 = vmatmul.mubr.f32.gmra.mrb[0].mxu0 %v1396
      %v1481 = vpop.f32.mrb[0].mxu0
      %v1482 = vadd.f32 0.0, %v1481
      %v1483 = vpop.f32.mrb[0].mxu0
      %1484 = vmatprep.mubr.f32.mxu0 0.0
      %1485 = vmatmul.mubr.f32.gmra.mrb[0].mxu0 %v1399
      %v1486 = vpop.f32.mrb[0].mxu0
      %v1487 = vadd.f32 0.0, %v1486
      %v1488 = vpop.f32.mrb[0].mxu0
      %1489 = vmatprep.mubr.f32.mxu0 0.0
      %1490 = vmatmul.mubr.f32.gmra.mrb[0].mxu0 %v1402
      %v1491 = vpop.f32.mrb[0].mxu0
      %v1492 = vadd.f32 0.0, %v1491
      %v1493 = vpop.f32.mrb[0].mxu0
      %1494 = vmatprep.mubr.f32.mxu0 0.0
      %1495 = vmatmul.mubr.f32.gmra.mrb[0].mxu0 %v1405
      %v1496 = vpop.f32.mrb[0].mxu0
      %v1497 = vadd.f32 0.0, %v1496
      %v1498 = vpop.f32.mrb[0].mxu0
      %1499 = vmatprep.mubr.f32.mxu0 0.0
      %1500 = vmatmul.mubr.f32.gmra.mrb[0].mxu0 %v1408
      %v1501 = vpop.f32.mrb[0].mxu0
      %v1502 = vadd.f32 0.0, %v1501
      %v1503 = vpop.f32.mrb[0].mxu0
      %1504 = vdwg.mxu0
      %v1505 = vadd.f32 %v1379, %v1477
      %v1506 = vadd.f32 %v1380, %v1482
      %v1507 = vadd.f32 %v1381, %v1487
      %v1508 = vadd.f32 %v1382, %v1492
      %v1509 = vadd.f32 %v1383, %v1497
      %v1510 = vadd.f32 %v1384, %v1502
      %v1511 = vld [vmem:[#allocation2 + $0x11] sm:$0xff]
      %v1512 = vld [vmem:[#allocation2 + $0x19] sm:$0xff]
      %v1513 = vld [vmem:[#allocation2 + $0x21] sm:$0xff]
      %v1514 = vld [vmem:[#allocation2 + $0x29] sm:$0xff]
      %v1515 = vld [vmem:[#allocation2 + $0x31] sm:$0xff]
      %v1516 = vld [vmem:[#allocation2 + $0x39] sm:$0xff]
      %v1517 = vld [vmem:[%s3 + $0x38] sm:$0xff]
      %v1519 = vsel %vm631, %v1511, 0
      %v1522 = vsel %vm631, %v1512, 0
      %v1525 = vsel %vm631, %v1513, 0
      %v1528 = vsel %vm631, %v1514, 0
      %v1531 = vsel %vm631, %v1515, 0
      %v1534 = vsel %vm631, %v1516, 0
      %1536 = vmatprep.subr.mxu0 0.0
      %1537 = vmatpush1.msra.mxu0 %v1517
      %1538 = vmatprep.subr.mxu0 0.0
      %1539 = vmatpush1.msra.mxu0 0.0
      %1540 = vmatprep.subr.mxu0 0.0
      %1541 = vmatpush1.msra.mxu0 0.0
      %1542 = vmatprep.subr.mxu0 0.0
      %1543 = vmatpush1.msra.mxu0 0.0
      %1544 = vmatprep.subr.mxu0 0.0
      %1545 = vmatpush1.msra.mxu0 0.0
      %1546 = vmatprep.subr.mxu0 0.0
      %1547 = vmatpush1.msra.mxu0 0.0
      %1548 = vmatprep.subr.mxu0 0.0
      %1549 = vmatpush1.msra.mxu0 0.0
      %1550 = vmatprep.subr.mxu0 0.0
      %1551 = vmatpush1.msra.mxu0 0.0
      %1552 = vmatprep.subr.mxu0 0.0
      %1553 = vmatpush1.msra.mxu0 0.0
      %1554 = vmatprep.subr.mxu0 0.0
      %1555 = vmatpush1.msra.mxu0 0.0
      %1556 = vmatprep.subr.mxu0 0.0
      %1557 = vmatpush1.msra.mxu0 0.0
      %1558 = vmatprep.subr.mxu0 0.0
      %1559 = vmatpush1.msra.mxu0 0.0
      %1560 = vmatprep.subr.mxu0 0.0
      %1561 = vmatpush1.msra.mxu0 0.0
      %1562 = vmatprep.subr.mxu0 0.0
      %1563 = vmatpush1.msra.mxu0 0.0
      %1564 = vmatprep.subr.mxu0 0.0
      %1565 = vmatpush1.msra.mxu0 0.0
      %1566 = vmatprep.subr.mxu0 0.0
      %1567 = vmatpush1.msra.mxu0 0.0
      %1568 = vmatprep.subr.mxu0 0.0
      %1569 = vmatpush1.msra.mxu0 0.0
      %1570 = vmatprep.subr.mxu0 0.0
      %1571 = vmatpush1.msra.mxu0 0.0
      %1572 = vmatprep.subr.mxu0 0.0
      %1573 = vmatpush1.msra.mxu0 0.0
      %1574 = vmatprep.subr.mxu0 0.0
      %1575 = vmatpush1.msra.mxu0 0.0
      %1576 = vmatprep.subr.mxu0 0.0
      %1577 = vmatpush1.msra.mxu0 0.0
      %1578 = vmatprep.subr.mxu0 0.0
      %1579 = vmatpush1.msra.mxu0 0.0
      %1580 = vmatprep.subr.mxu0 0.0
      %1581 = vmatpush1.msra.mxu0 0.0
      %1582 = vmatprep.subr.mxu0 0.0
      %1583 = vmatpush1.msra.mxu0 0.0
      %1584 = vmatprep.subr.mxu0 0.0
      %1585 = vmatpush1.msra.mxu0 0.0
      %1586 = vmatprep.subr.mxu0 0.0
      %1587 = vmatpush1.msra.mxu0 0.0
      %1588 = vmatprep.subr.mxu0 0.0
      %1589 = vmatpush1.msra.mxu0 0.0
      %1590 = vmatprep.subr.mxu0 0.0
      %1591 = vmatpush1.msra.mxu0 0.0
      %1592 = vmatprep.subr.mxu0 0.0
      %1593 = vmatpush1.msra.mxu0 0.0
      %1594 = vmatprep.subr.mxu0 0.0
      %1595 = vmatpush1.msra.mxu0 0.0
      %1596 = vmatprep.subr.mxu0 0.0
      %1597 = vmatpush1.msra.mxu0 0.0
      %1598 = vmatprep.subr.mxu0 0.0
      %1599 = vmatpush1.msra.mxu0 0.0
      %1600 = vmatprep.mubr.f32.mxu0 0.0
      %1601 = vmatmul.mubr.f32.gmra.mrb[0].mxu0 %v1519
      %v1602 = vpop.f32.mrb[0].mxu0
      %v1603 = vadd.f32 0.0, %v1602
      %v1604 = vpop.f32.mrb[0].mxu0
      %1605 = vmatprep.mubr.f32.mxu0 0.0
      %1606 = vmatmul.mubr.f32.gmra.mrb[0].mxu0 %v1522
      %v1607 = vpop.f32.mrb[0].mxu0
      %v1608 = vadd.f32 0.0, %v1607
      %v1609 = vpop.f32.mrb[0].mxu0
      %1610 = vmatprep.mubr.f32.mxu0 0.0
      %1611 = vmatmul.mubr.f32.gmra.mrb[0].mxu0 %v1525
      %v1612 = vpop.f32.mrb[0].mxu0
      %v1613 = vadd.f32 0.0, %v1612
      %v1614 = vpop.f32.mrb[0].mxu0
      %1615 = vmatprep.mubr.f32.mxu0 0.0
      %1616 = vmatmul.mubr.f32.gmra.mrb[0].mxu0 %v1528
      %v1617 = vpop.f32.mrb[0].mxu0
      %v1618 = vadd.f32 0.0, %v1617
      %v1619 = vpop.f32.mrb[0].mxu0
      %1620 = vmatprep.mubr.f32.mxu0 0.0
      %1621 = vmatmul.mubr.f32.gmra.mrb[0].mxu0 %v1531
      %v1622 = vpop.f32.mrb[0].mxu0
      %v1623 = vadd.f32 0.0, %v1622
      %v1624 = vpop.f32.mrb[0].mxu0
      %1625 = vmatprep.mubr.f32.mxu0 0.0
      %1626 = vmatmul.mubr.f32.gmra.mrb[0].mxu0 %v1534
      %v1627 = vpop.f32.mrb[0].mxu0
      %v1628 = vadd.f32 0.0, %v1627
      %v1629 = vpop.f32.mrb[0].mxu0
      %1630 = vdwg.mxu0
      %v1631 = vadd.f32 %v1505, %v1603
      %v1632 = vadd.f32 %v1506, %v1608
      %v1633 = vadd.f32 %v1507, %v1613
      %v1634 = vadd.f32 %v1508, %v1618
      %v1635 = vadd.f32 %v1509, %v1623
      %v1636 = vadd.f32 %v1510, %v1628
      %v1637 = vld [vmem:[#allocation2 + $0x12] sm:$0xff]
      %v1638 = vld [vmem:[#allocation2 + $0x1a] sm:$0xff]
      %v1639 = vld [vmem:[#allocation2 + $0x22] sm:$0xff]
      %v1640 = vld [vmem:[#allocation2 + $0x2a] sm:$0xff]
      %v1641 = vld [vmem:[#allocation2 + $0x32] sm:$0xff]
      %v1642 = vld [vmem:[#allocation2 + $0x3a] sm:$0xff]
      %v1643 = vld [vmem:[%s3 + $0x40] sm:$0xff]
      %v1645 = vsel %vm631, %v1637, 0
      %v1648 = vsel %vm631, %v1638, 0
      %v1651 = vsel %vm631, %v1639, 0
      %v1654 = vsel %vm631, %v1640, 0
      %v1657 = vsel %vm631, %v1641, 0
      %v1660 = vsel %vm631, %v1642, 0
      %1662 = vmatprep.subr.mxu0 0.0
      %1663 = vmatpush1.msra.mxu0 %v1643
      %1664 = vmatprep.subr.mxu0 0.0
      %1665 = vmatpush1.msra.mxu0 0.0
      %1666 = vmatprep.subr.mxu0 0.0
      %1667 = vmatpush1.msra.mxu0 0.0
      %1668 = vmatprep.subr.mxu0 0.0
      %1669 = vmatpush1.msra.mxu0 0.0
      %1670 = vmatprep.subr.mxu0 0.0
      %1671 = vmatpush1.msra.mxu0 0.0
      %1672 = vmatprep.subr.mxu0 0.0
      %1673 = vmatpush1.msra.mxu0 0.0
      %1674 = vmatprep.subr.mxu0 0.0
      %1675 = vmatpush1.msra.mxu0 0.0
      %1676 = vmatprep.subr.mxu0 0.0
      %1677 = vmatpush1.msra.mxu0 0.0
      %1678 = vmatprep.subr.mxu0 0.0
      %1679 = vmatpush1.msra.mxu0 0.0
      %1680 = vmatprep.subr.mxu0 0.0
      %1681 = vmatpush1.msra.mxu0 0.0
      %1682 = vmatprep.subr.mxu0 0.0
      %1683 = vmatpush1.msra.mxu0 0.0
      %1684 = vmatprep.subr.mxu0 0.0
      %1685 = vmatpush1.msra.mxu0 0.0
      %1686 = vmatprep.subr.mxu0 0.0
      %1687 = vmatpush1.msra.mxu0 0.0
      %1688 = vmatprep.subr.mxu0 0.0
      %1689 = vmatpush1.msra.mxu0 0.0
      %1690 = vmatprep.subr.mxu0 0.0
      %1691 = vmatpush1.msra.mxu0 0.0
      %1692 = vmatprep.subr.mxu0 0.0
      %1693 = vmatpush1.msra.mxu0 0.0
      %1694 = vmatprep.subr.mxu0 0.0
      %1695 = vmatpush1.msra.mxu0 0.0
      %1696 = vmatprep.subr.mxu0 0.0
      %1697 = vmatpush1.msra.mxu0 0.0
      %1698 = vmatprep.subr.mxu0 0.0
      %1699 = vmatpush1.msra.mxu0 0.0
      %1700 = vmatprep.subr.mxu0 0.0
      %1701 = vmatpush1.msra.mxu0 0.0
      %1702 = vmatprep.subr.mxu0 0.0
      %1703 = vmatpush1.msra.mxu0 0.0
      %1704 = vmatprep.subr.mxu0 0.0
      %1705 = vmatpush1.msra.mxu0 0.0
      %1706 = vmatprep.subr.mxu0 0.0
      %1707 = vmatpush1.msra.mxu0 0.0
      %1708 = vmatprep.subr.mxu0 0.0
      %1709 = vmatpush1.msra.mxu0 0.0
      %1710 = vmatprep.subr.mxu0 0.0
      %1711 = vmatpush1.msra.mxu0 0.0
      %1712 = vmatprep.subr.mxu0 0.0
      %1713 = vmatpush1.msra.mxu0 0.0
      %1714 = vmatprep.subr.mxu0 0.0
      %1715 = vmatpush1.msra.mxu0 0.0
      %1716 = vmatprep.subr.mxu0 0.0
      %1717 = vmatpush1.msra.mxu0 0.0
      %1718 = vmatprep.subr.mxu0 0.0
      %1719 = vmatpush1.msra.mxu0 0.0
      %1720 = vmatprep.subr.mxu0 0.0
      %1721 = vmatpush1.msra.mxu0 0.0
      %1722 = vmatprep.subr.mxu0 0.0
      %1723 = vmatpush1.msra.mxu0 0.0
      %1724 = vmatprep.subr.mxu0 0.0
      %1725 = vmatpush1.msra.mxu0 0.0
      %1726 = vmatprep.mubr.f32.mxu0 0.0
      %1727 = vmatmul.mubr.f32.gmra.mrb[0].mxu0 %v1645
      %v1728 = vpop.f32.mrb[0].mxu0
      %v1729 = vadd.f32 0.0, %v1728
      %v1730 = vpop.f32.mrb[0].mxu0
      %1731 = vmatprep.mubr.f32.mxu0 0.0
      %1732 = vmatmul.mubr.f32.gmra.mrb[0].mxu0 %v1648
      %v1733 = vpop.f32.mrb[0].mxu0
      %v1734 = vadd.f32 0.0, %v1733
      %v1735 = vpop.f32.mrb[0].mxu0
      %1736 = vmatprep.mubr.f32.mxu0 0.0
      %1737 = vmatmul.mubr.f32.gmra.mrb[0].mxu0 %v1651
      %v1738 = vpop.f32.mrb[0].mxu0
      %v1739 = vadd.f32 0.0, %v1738
      %v1740 = vpop.f32.mrb[0].mxu0
      %1741 = vmatprep.mubr.f32.mxu0 0.0
      %1742 = vmatmul.mubr.f32.gmra.mrb[0].mxu0 %v1654
      %v1743 = vpop.f32.mrb[0].mxu0
      %v1744 = vadd.f32 0.0, %v1743
      %v1745 = vpop.f32.mrb[0].mxu0
      %1746 = vmatprep.mubr.f32.mxu0 0.0
      %1747 = vmatmul.mubr.f32.gmra.mrb[0].mxu0 %v1657
      %v1748 = vpop.f32.mrb[0].mxu0
      %v1749 = vadd.f32 0.0, %v1748
      %v1750 = vpop.f32.mrb[0].mxu0
      %1751 = vmatprep.mubr.f32.mxu0 0.0
      %1752 = vmatmul.mubr.f32.gmra.mrb[0].mxu0 %v1660
      %v1753 = vpop.f32.mrb[0].mxu0
      %v1754 = vadd.f32 0.0, %v1753
      %v1755 = vpop.f32.mrb[0].mxu0
      %1756 = vdwg.mxu0
      %v1757 = vadd.f32 %v1631, %v1729
      %v1758 = vadd.f32 %v1632, %v1734
      %v1759 = vadd.f32 %v1633, %v1739
      %v1760 = vadd.f32 %v1634, %v1744
      %v1761 = vadd.f32 %v1635, %v1749
      %v1762 = vadd.f32 %v1636, %v1754
      %v1763 = vld [vmem:[%s4] sm:$0x1]
      %v1764 = vmax.f32 %v1757, %v1758
      %v1765 = vmax.f32 %v1758, %v1759
      %v1766 = vmax.f32 %v1759, %v1760
      %v1767 = vmax.f32 %v1760, %v1761
      %v1768 = vmax.f32 %v1761, %v1762
      %1769 = vst.msk [vmem:[#allocation3] sm:$0xff] %vm631, %v1764
      %1770 = vst.msk [vmem:[#allocation3 + $0x8] sm:$0xff] %vm631, %v1765
      %1771 = vst.msk [vmem:[#allocation3 + $0x10] sm:$0xff] %vm631, %v1766
      %1772 = vst.msk [vmem:[#allocation3 + $0x18] sm:$0xff] %vm631, %v1767
      %1773 = vst.msk [vmem:[#allocation3 + $0x20] sm:$0xff] %vm631, %v1768
      %v1774 = vld [vmem:[#allocation3] ss:$2 sm:$0x7]
      %s1775 = scalar_lea.vmem [#allocation3], 1
      %v1776 = vld [vmem:[%s1775] ss:$2 sm:$0x7]
      %v1777 = vmax.f32 %v1774, %v1776
      %v1779 = vlaneseq
      %v1780 = vshrl.u32 %v1779, 7
      %v1781 = vsub.s32 0, %v1780
      %v1782 = vrot.slane %v1763, %v1781
      %v1784 = vadd.f32 %v1777, %v1782
      %v1785 = vmax.f32 %v1784, 0.0
      %vm1786 = vcmask 59392
      %1787 = vst.msk [vmem:[%s224] sm:$0x7] %vm1786, %v1785
      %s1788 = scalar_lea.vmem [#allocation3], 16
      %v1789 = vld [vmem:[%s1788] ss:$2 sm:$0x7]
      %s1790 = scalar_lea.vmem [#allocation3], 17
      %v1791 = vld [vmem:[%s1790] ss:$2 sm:$0x7]
      %v1792 = vmax.f32 %v1789, %v1791
      %v1793 = vadd.f32 %v1792, %v1782
      %v1794 = vmax.f32 %v1793, 0.0
      %s1795 = scalar_lea.vmem %s224, 4
      %1796 = vst.msk [vmem:[%s1795] sm:$0x7] %vm1786, %v1794
      %s1797 = scalar_lea.vmem [#allocation3], 32
      %v1798 = vld [vmem:[%s1797] ss:$2 sm:$0x7]
      %s1799 = scalar_lea.vmem [#allocation3], 33
      %v1800 = vld [vmem:[%s1799] ss:$2 sm:$0x7]
      %v1801 = vmax.f32 %v1798, %v1800
      %v1802 = vadd.f32 %v1801, %v1782
      %v1803 = vmax.f32 %v1802, 0.0
      %s1804 = scalar_lea.vmem %s224, 8
      %1805 = vst.msk [vmem:[%s1804] sm:$0x7] %vm1786, %v1803
      %p1806 = scmp.lt.s32.totalorder %s16, 1
      %s1807 = scalar_select %p1806, %s16, 1
      %s1808 = smul.addr %s1807, 3
      %s1809 = smul.addr %s1808, 4
      %s1810 = scalar_lea.vmem %s5, %s1809
      // Predicated region
      $region41: #{tpu_custom_call.1} parent=39 // pred_check
        %p1811 = pneg %p144
      $region42: #{tpu_custom_call.1} parent=39 // pred_check_branch
        %1813 = sbr.rel (%p1811) target = $region44
      $region43: #{tpu_custom_call.1} parent=39 // pred_region
        _
      $region44: #{tpu_custom_call.1} parent=39 // pred_fallthru
        _
    $region40: #{tpu_custom_call.1} parent=5 // pred_fallthru
      _
    %p1814 = scmp.le.s32.totalorder 2, %s11
    // Predicated region
    $region45: #{tpu_custom_call.1} parent=5 // pred_check
      %p1815 = pneg %p1814
    $region46: #{tpu_custom_call.1} parent=5 // pred_check_branch
      %1817 = sbr.rel (%p1815) target = $region48
    $region47: #{tpu_custom_call.1} parent=5 // pred_region
      %s1818 = ssub.s32 %s11, 2
      // Predicated region
      $region49: #{tpu_custom_call.1} parent=47 // pred_check
        %p1819 = pneg %p150
      $region50: #{tpu_custom_call.1} parent=47 // pred_check_branch
        %1821 = sbr.rel (%p1819) target = $region52
      $region51: #{tpu_custom_call.1} parent=47 // pred_region
        %p1822 = scmp.lt.s32.totalorder %s17, 1
        %s1823 = scalar_select %p1822, %s17, 1
        %s1824 = smul.addr %s1823, 3
        %s1825 = smul.addr %s1824, 4
        %s1826 = scalar_lea.vmem %s5, %s1825
      $region52: #{tpu_custom_call.1} parent=47 // pred_fallthru
        _
    $region48: #{tpu_custom_call.1} parent=5 // pred_fallthru
      _
  $region6: #{tpu_custom_call.1} parent=0 // loop_footer
    %s15 = sadd.s32 1, %s11
  $region7: #{tpu_custom_call.1} parent=0 // loop_footer_branch
    %10 = sbr.rel target = $region3
  $region8: #{tpu_custom_call.1} parent=0 // loop_exit
    _

</llo_original>
